<compile_context>
chip_gen: v7x
topology: tpu7x:2x2x1
jax: 0.10.0
libtpu: 0.0.40
codegen_flags: <defaults>
</compile_context>

<pallas_src>
import functools

import jax
import jax.numpy as jnp
from jax.experimental import pallas as pl
from jax.experimental.pallas import tpu as pltpu


def _critic_mlp_kernel(x_ref, w1_ref, b1_ref, w2_ref, b2_ref, w3_ref, b3_ref,
                       o_ref, *, act_dtype):
    # x: (TBp, pack*obs_dim) bf16 tile of packed observations.
    x = x_ref[...]

    # Layer 1: MXU matmul (bf16 in, f32 acc) + f32 bias, tanh in act_dtype.
    z1 = jnp.dot(x, w1_ref[...], preferred_element_type=jnp.float32)
    h1 = jnp.tanh((z1 + b1_ref[...]).astype(act_dtype)).astype(jnp.bfloat16)

    # Layer 2: (TBp, pack*H) @ (pack*H, pack*H) — full 128-wide MXU work.
    z2 = jnp.dot(h1, w2_ref[...], preferred_element_type=jnp.float32)
    h2 = jnp.tanh((z2 + b2_ref[...]).astype(act_dtype)).astype(jnp.bfloat16)

    # Output head: block-diagonal (pack*H, pack) matmul -> (TBp, pack).
    # One tiny matmul per tile; MXU is otherwise idle, and this avoids any
    # in-kernel lane-split reshape for a segmented reduction.
    v = jnp.dot(h2, w3_ref[...], preferred_element_type=jnp.float32)
    o_ref[...] = (v + b3_ref[...]).astype(o_ref.dtype)


def critic_forward(obs, params, *, block_b=4096, pack=8,
                   act_dtype=jnp.bfloat16):
    """Equivalent of Critic.forward(obs): torch.squeeze(critic_net(obs), -1)."""
    w1, b1, w2, b2, w3, b3 = params
    B, obs_dim = obs.shape
    H = w1.shape[1]

    # ---- batch tiling ------------------------------------------------------
    # Align the (unpacked) batch tile to pack*128 so packed blocks have a
    # sublane extent that's a multiple of 128 (safe for bf16 (16,128) tiling).
    align = pack * 128
    tb = max(align, (int(block_b) // align) * align)
    b_ceil = pl.cdiv(B, align) * align
    tb = min(tb, b_ceil)
    # Keep >= 2 tiles when there is enough work so the "parallel" axis can be
    # sharded across v7x's two TensorCores (no-op on v5e/v6e).
    if (b_ceil // tb) < 2 and b_ceil > align:
        tb = pl.cdiv(tb // 2, align) * align
    num_tiles = pl.cdiv(b_ceil, tb)
    b_pad = num_tiles * tb
    tbp = tb // pack                      # packed rows per tile

    # ---- input packing (free, row-major reshape) ---------------------------
    x = obs.astype(jnp.bfloat16)
    if b_pad != B:
        x = jnp.pad(x, ((0, b_pad - B), (0, 0)))
    x = x.reshape(b_pad // pack, pack * obs_dim)

    # ---- block-diagonal / tiled parameters (tiny, built once per call) -----
    eye = jnp.eye(pack, dtype=jnp.float32)
    w1_bd = jnp.kron(eye, w1.astype(jnp.float32)).astype(jnp.bfloat16)
    w2_bd = jnp.kron(eye, w2.astype(jnp.float32)).astype(jnp.bfloat16)
    w3_bd = jnp.kron(eye, w3.reshape(H, 1).astype(jnp.float32)).astype(jnp.bfloat16)
    b1_t = jnp.tile(b1.reshape(1, H).astype(jnp.float32), (1, pack))
    b2_t = jnp.tile(b2.reshape(1, H).astype(jnp.float32), (1, pack))
    b3_t = jnp.tile(b3.reshape(1, 1).astype(jnp.float32), (1, pack))

    cost = pl.CostEstimate(
        flops=2 * b_pad * (obs_dim * H + H * H + H),
        transcendentals=2 * b_pad * H,
        bytes_accessed=(b_pad * obs_dim * 2            # bf16 obs in
                        + b_pad * 4                    # f32 values out
                        + (w1_bd.size + w2_bd.size + w3_bd.size) * 2
                        + (b1_t.size + b2_t.size + b3_t.size) * 4),
    )

    kernel = functools.partial(_critic_mlp_kernel, act_dtype=act_dtype)

    out = pl.pallas_call(
        kernel,
        out_shape=jax.ShapeDtypeStruct((b_pad // pack, pack), jnp.float32),
        grid=(num_tiles,),
        in_specs=[
            pl.BlockSpec((tbp, pack * obs_dim), lambda i: (i, 0)),   # obs: tiled
            pl.BlockSpec((pack * obs_dim, pack * H), lambda i: (0, 0)),  # W1_bd
            pl.BlockSpec((1, pack * H), lambda i: (0, 0)),               # b1
            pl.BlockSpec((pack * H, pack * H), lambda i: (0, 0)),        # W2_bd
            pl.BlockSpec((1, pack * H), lambda i: (0, 0)),               # b2
            pl.BlockSpec((pack * H, pack), lambda i: (0, 0)),            # W3_bd
            pl.BlockSpec((1, pack), lambda i: (0, 0)),                   # b3
        ],
        out_specs=pl.BlockSpec((tbp, pack), lambda i: (i, 0)),
        compiler_params=pltpu.CompilerParams(
            dimension_semantics=("parallel",),
            vmem_limit_bytes=32 * 1024 * 1024,   # ample even at block_b=8192; < v7x's 64 MiB
        ),
        cost_estimate=cost,
    )(x, w1_bd, b1_t, w2_bd, b2_t, w3_bd, b3_t)

    # Unpack (row-major) + drop batch padding -> (B,)  (== torch.squeeze(..., -1))
    return out.reshape(b_pad)[:B]


def init_critic_params(key, obs_dim, hidden):
    """Deterministic small-uniform init (mimics nn.Linear default scale)."""
    k1, k2, k3, k4, k5, k6 = jax.random.split(key, 6)

    def lin(kw, kb, fan_in, fan_out):
        bound = 1.0 / jnp.sqrt(fan_in)
        w = jax.random.uniform(kw, (fan_in, fan_out), jnp.float32,
                               minval=-bound, maxval=bound)
        b = jax.random.uniform(kb, (1, fan_out), jnp.float32,
                               minval=-bound, maxval=bound)
        return w, b

    w1, b1 = lin(k1, k2, obs_dim, hidden)
    w2, b2 = lin(k3, k4, hidden, hidden)
    w3, b3 = lin(k5, k6, hidden, 1)
    return (w1, b1, w2, b2, w3, b3)


if __name__ == "__main__":
    # Small demo shapes: B is not a multiple of the tile so padding and a
    # multi-step grid are both exercised.
    B, OBS_DIM, HIDDEN = 2500, 16, 64

    key = jax.random.PRNGKey(0)
    k_obs, k_params = jax.random.split(key)

    obs = jax.random.normal(k_obs, (B, OBS_DIM), dtype=jnp.float32)
    params = init_critic_params(k_params, OBS_DIM, HIDDEN)

    fwd = jax.jit(functools.partial(critic_forward, block_b=1024))
    value = jax.block_until_ready(fwd(obs, params))

    # Pure-JAX f32 reference of the same MLP (kernel uses bf16 MXU inputs and
    # bf16 tanh, so compare with a loosened tolerance).
    w1, b1, w2, b2, w3, b3 = params
    h1 = jnp.tanh(obs @ w1 + b1)
    h2 = jnp.tanh(h1 @ w2 + b2)
    ref = jnp.squeeze(h2 @ w3 + b3, axis=-1)

    assert value.shape == (B,), value.shape
    max_err = float(jnp.max(jnp.abs(value - ref)))
    assert max_err < 1e-1, f"max abs error {max_err}"

    print("KERNEL_OK")
</pallas_src>

<mosaic_0001>
module attributes {stable_mosaic.version = 11 : i64} {
  func.func @_critic_mlp_kernel(%arg0: i32, %arg1: memref<128x128xbf16, #tpu.memory_space<vmem>>, %arg2: memref<128x512xbf16, #tpu.memory_space<vmem>>, %arg3: memref<1x512xf32, #tpu.memory_space<vmem>>, %arg4: memref<512x512xbf16, #tpu.memory_space<vmem>>, %arg5: memref<1x512xf32, #tpu.memory_space<vmem>>, %arg6: memref<512x8xbf16, #tpu.memory_space<vmem>>, %arg7: memref<1x8xf32, #tpu.memory_space<vmem>>, %arg8: memref<128x8xf32, #tpu.memory_space<vmem>>) attributes {dimension_semantics = [#tpu.dimension_semantics<parallel>], iteration_bounds = array<i64: 3>, scalar_prefetch = 0 : i64, scratch_operands = 0 : i64, tpu.core_type = #tpu.core_type<tc>, window_params = [{transform_indices = @transform_0, window_bounds = array<i64: 128, 128>}, {pipeline_mode = #tpu.pipeline_mode<synchronous>, transform_indices = @transform_1, window_bounds = array<i64: 128, 512>}, {pipeline_mode = #tpu.pipeline_mode<synchronous>, transform_indices = @transform_2, window_bounds = array<i64: 1, 512>}, {pipeline_mode = #tpu.pipeline_mode<synchronous>, transform_indices = @transform_3, window_bounds = array<i64: 512, 512>}, {pipeline_mode = #tpu.pipeline_mode<synchronous>, transform_indices = @transform_4, window_bounds = array<i64: 1, 512>}, {pipeline_mode = #tpu.pipeline_mode<synchronous>, transform_indices = @transform_5, window_bounds = array<i64: 512, 8>}, {pipeline_mode = #tpu.pipeline_mode<synchronous>, transform_indices = @transform_6, window_bounds = array<i64: 1, 8>}, {transform_indices = @transform_7, window_bounds = array<i64: 128, 8>}]} {
    %c0 = arith.constant 0 : index
    %c0_0 = arith.constant 0 : index
    %0 = vector.load %arg1[%c0, %c0_0] : memref<128x128xbf16, #tpu.memory_space<vmem>>, vector<128x128xbf16>
    %c0_1 = arith.constant 0 : index
    %c0_2 = arith.constant 0 : index
    %1 = vector.load %arg2[%c0_1, %c0_2] : memref<128x512xbf16, #tpu.memory_space<vmem>>, vector<128x512xbf16>
    %cst = arith.constant dense<0.000000e+00> : vector<128x512xf32>
    %2 = tpu.matmul %0, %1, %cst {dimension_numbers = #tpu.dot_dimension_numbers<[1], [0], [0], [1], [0, 0, 1, 1], [], []>} : vector<128x128xbf16>, vector<128x512xbf16>, vector<128x512xf32> -> vector<128x512xf32>
    %c0_3 = arith.constant 0 : index
    %c0_4 = arith.constant 0 : index
    %3 = vector.load %arg3[%c0_3, %c0_4] : memref<1x512xf32, #tpu.memory_space<vmem>>, vector<1x512xf32>
    %4 = vector.broadcast %3 : vector<1x512xf32> to vector<128x512xf32>
    %5 = arith.addf %2, %4 : vector<128x512xf32>
    %6 = arith.truncf %5 : vector<128x512xf32> to vector<128x512xbf16>
    %7 = math.tanh %6 : vector<128x512xbf16>
    %c0_5 = arith.constant 0 : index
    %c0_6 = arith.constant 0 : index
    %8 = vector.load %arg4[%c0_5, %c0_6] : memref<512x512xbf16, #tpu.memory_space<vmem>>, vector<512x512xbf16>
    %cst_7 = arith.constant dense<0.000000e+00> : vector<128x512xf32>
    %9 = tpu.matmul %7, %8, %cst_7 {dimension_numbers = #tpu.dot_dimension_numbers<[1], [0], [0], [1], [0, 0, 1, 1], [], []>} : vector<128x512xbf16>, vector<512x512xbf16>, vector<128x512xf32> -> vector<128x512xf32>
    %c0_8 = arith.constant 0 : index
    %c0_9 = arith.constant 0 : index
    %10 = vector.load %arg5[%c0_8, %c0_9] : memref<1x512xf32, #tpu.memory_space<vmem>>, vector<1x512xf32>
    %11 = vector.broadcast %10 : vector<1x512xf32> to vector<128x512xf32>
    %12 = arith.addf %9, %11 : vector<128x512xf32>
    %13 = arith.truncf %12 : vector<128x512xf32> to vector<128x512xbf16>
    %14 = math.tanh %13 : vector<128x512xbf16>
    %c0_10 = arith.constant 0 : index
    %c0_11 = arith.constant 0 : index
    %15 = vector.load %arg6[%c0_10, %c0_11] : memref<512x8xbf16, #tpu.memory_space<vmem>>, vector<512x8xbf16>
    %cst_12 = arith.constant dense<0.000000e+00> : vector<128x8xf32>
    %16 = tpu.matmul %14, %15, %cst_12 {dimension_numbers = #tpu.dot_dimension_numbers<[1], [0], [0], [1], [0, 0, 1, 1], [], []>} : vector<128x512xbf16>, vector<512x8xbf16>, vector<128x8xf32> -> vector<128x8xf32>
    %c0_13 = arith.constant 0 : index
    %c0_14 = arith.constant 0 : index
    %17 = vector.load %arg7[%c0_13, %c0_14] : memref<1x8xf32, #tpu.memory_space<vmem>>, vector<1x8xf32>
    %18 = vector.broadcast %17 : vector<1x8xf32> to vector<128x8xf32>
    %19 = arith.addf %16, %18 : vector<128x8xf32>
    %c0_15 = arith.constant 0 : index
    %c0_16 = arith.constant 0 : index
    %20 = vector.load %arg8[%c0_15, %c0_16] : memref<128x8xf32, #tpu.memory_space<vmem>>, vector<128x8xf32>
    tpu.vector_store %arg8[%c0_15, %c0_16], %19 {strides = array<i32>} : memref<128x8xf32, #tpu.memory_space<vmem>>, vector<128x8xf32>,
    return
  }
  func.func @transform_0(%arg0: i32) -> (i32, i32) {
    %c0_i32 = arith.constant 0 : i32
    %c0_i32_0 = arith.constant 0 : i32
    return %arg0, %c0_i32 : i32, i32
  }
  func.func @transform_1(%arg0: i32) -> (i32, i32) {
    %c0_i32 = arith.constant 0 : i32
    %c0_i32_0 = arith.constant 0 : i32
    %c0_i32_1 = arith.constant 0 : i32
    return %c0_i32, %c0_i32_0 : i32, i32
  }
  func.func @transform_2(%arg0: i32) -> (i32, i32) {
    %c0_i32 = arith.constant 0 : i32
    %c0_i32_0 = arith.constant 0 : i32
    %c0_i32_1 = arith.constant 0 : i32
    return %c0_i32, %c0_i32_0 : i32, i32
  }
  func.func @transform_3(%arg0: i32) -> (i32, i32) {
    %c0_i32 = arith.constant 0 : i32
    %c0_i32_0 = arith.constant 0 : i32
    %c0_i32_1 = arith.constant 0 : i32
    return %c0_i32, %c0_i32_0 : i32, i32
  }
  func.func @transform_4(%arg0: i32) -> (i32, i32) {
    %c0_i32 = arith.constant 0 : i32
    %c0_i32_0 = arith.constant 0 : i32
    %c0_i32_1 = arith.constant 0 : i32
    return %c0_i32, %c0_i32_0 : i32, i32
  }
  func.func @transform_5(%arg0: i32) -> (i32, i32) {
    %c0_i32 = arith.constant 0 : i32
    %c0_i32_0 = arith.constant 0 : i32
    %c0_i32_1 = arith.constant 0 : i32
    return %c0_i32, %c0_i32_0 : i32, i32
  }
  func.func @transform_6(%arg0: i32) -> (i32, i32) {
    %c0_i32 = arith.constant 0 : i32
    %c0_i32_0 = arith.constant 0 : i32
    %c0_i32_1 = arith.constant 0 : i32
    return %c0_i32, %c0_i32_0 : i32, i32
  }
  func.func @transform_7(%arg0: i32) -> (i32, i32) {
    %c0_i32 = arith.constant 0 : i32
    %c0_i32_0 = arith.constant 0 : i32
    return %arg0, %c0_i32 : i32, i32
  }
}

</mosaic_0001>

<llo_original>
// kernel: critic_forward.1
$region0: #{critic_forward.1}
  #allocation0 [shape = 'u32[]', space=smem, size = 0x4, offset = 0x4, fixed_abs, tag = 'smem constant byte address 0x4 - core index']
  #allocation1 [shape = 'u32[144,128]{1,0:T(1,128)}', space=vmem, size = 0x12000, scoped, tag = 'internal scratch']
  %s0 = inlined_call_operand.vmem [shape: bf16[384,128], index: 0, kind: input, shape index: {}]
  %s1 = inlined_call_operand.vmem [shape: bf16[128,512], index: 1, kind: input, shape index: {}]
  %s2 = inlined_call_operand.vmem [shape: f32[1,512], index: 2, kind: input, shape index: {}]
  %s3 = inlined_call_operand.vmem [shape: bf16[512,512], index: 3, kind: input, shape index: {}]
  %s4 = inlined_call_operand.vmem [shape: f32[1,512], index: 4, kind: input, shape index: {}]
  %s5 = inlined_call_operand.vmem [shape: bf16[512,8], index: 5, kind: input, shape index: {}]
  %s6 = inlined_call_operand.vmem [shape: f32[1,8], index: 6, kind: input, shape index: {}]
  %s7 = inlined_call_operand.vmem [shape: f32[384,8], index: 7, kind: output, shape index: {}]
  %s8 = sld [smem:[#allocation0]]
  $region61: #{critic_forward.1} parent=0
    _
  %s10 = ssub.s32 1, %s8
  %s11 = scalar_select 0, %s10, %s8
  loop: start=0, step=1, limit=5
  $region2: #{critic_forward.1} parent=0 // loop_pre_header
    _
  $region3: #{critic_forward.1} parent=0 // loop_header
    %s13 = sphi 0, %s17
    %p14 = scmp.ge.s32.totalorder %s13, 5
    %s23 = sphi 0, %s25
    %s26 = sphi 0, %s23
    %s27 = sphi 0, %s26
    %s43 = sphi 0, %s27
    %s47 = sphi 0, %s47
    %s49 = sphi 0, %s47
    %s50 = sphi 0, %s49
    %s64 = sphi 0, %s50
    %s68 = sphi 0, %s68
    %s70 = sphi 0, %s68
    %s71 = sphi 0, %s70
    %s85 = sphi 0, %s71
    %s89 = sphi 0, %s89
    %s91 = sphi 0, %s89
    %s92 = sphi 0, %s91
    %s106 = sphi 0, %s92
    %s110 = sphi 0, %s110
    %s112 = sphi 0, %s110
    %s113 = sphi 0, %s112
    %s127 = sphi 0, %s113
    %s131 = sphi 0, %s131
    %s133 = sphi 0, %s131
    %s134 = sphi 0, %s133
    %s148 = sphi 0, %s134
    %s152 = sphi 0, %s152
    %s154 = sphi 0, %s152
    %s155 = sphi 0, %s154
    %s169 = sphi 0, %s155
    %s175 = sphi 0, %s177
    %s178 = sphi 0, %s175
    %s179 = sphi 0, %s178
    %s195 = sphi 0, %s179
  $region4: #{critic_forward.1} parent=0 // loop_header_branch
    %16 = sbr.rel (%p14) target = $region8
  $region5: #{critic_forward.1} parent=0 // loop_body
    %s18 = ssub.s32 %s13, 1
    %s19 = ssub.s32 %s13, 2
    %s20 = sadd.s32 %s13, 1
    %s21 = ssub.s32 %s13, %s20
    %p22 = scmp.eq.s32.totalorder %s21, 0
    %s24 = sadd.s32 %s23, 1
    %s25 = scalar_select %p22, %s23, %s24
    %p28 = pneg %p22
    %p29 = scmp.eq.s32.totalorder %s13, 2
    %p30 = por %p28, %p29
    %p31 = scmp.ne.s32.totalorder %s23, %s26
    %p32 = scmp.eq.s32.totalorder %s13, 0
    %p33 = por %p31, %p32
    %p34 = scmp.ne.s32.totalorder %s23, %s26
    %p35 = scmp.eq.s32.totalorder %s18, 2
    %p36 = por %p34, %p35
    %p37 = scmp.ne.s32.totalorder %s26, %s27
    %p38 = scmp.eq.s32.totalorder %s18, 0
    %p39 = por %p37, %p38
    %p40 = scmp.ne.s32.totalorder %s26, %s27
    %p41 = scmp.eq.s32.totalorder %s19, 2
    %p42 = por %p40, %p41
    %p44 = scmp.ne.s32.totalorder %s27, %s43
    %p45 = scmp.eq.s32.totalorder %s19, 0
    %p46 = por %p44, %p45
    %s48 = sadd.s32 %s47, 1
    %p51 = scmp.eq.s32.totalorder %s13, 2
    %p52 = scmp.ne.s32.totalorder %s47, %s49
    %p53 = scmp.eq.s32.totalorder %s13, 0
    %p54 = por %p52, %p53
    %p55 = scmp.ne.s32.totalorder %s47, %s49
    %p56 = scmp.eq.s32.totalorder %s18, 2
    %p57 = por %p55, %p56
    %p58 = scmp.ne.s32.totalorder %s49, %s50
    %p59 = scmp.eq.s32.totalorder %s18, 0
    %p60 = por %p58, %p59
    %p61 = scmp.ne.s32.totalorder %s49, %s50
    %p62 = scmp.eq.s32.totalorder %s19, 2
    %p63 = por %p61, %p62
    %p65 = scmp.ne.s32.totalorder %s50, %s64
    %p66 = scmp.eq.s32.totalorder %s19, 0
    %p67 = por %p65, %p66
    %s69 = sadd.s32 %s68, 1
    %p72 = scmp.eq.s32.totalorder %s13, 2
    %p73 = scmp.ne.s32.totalorder %s68, %s70
    %p74 = scmp.eq.s32.totalorder %s13, 0
    %p75 = por %p73, %p74
    %p76 = scmp.ne.s32.totalorder %s68, %s70
    %p77 = scmp.eq.s32.totalorder %s18, 2
    %p78 = por %p76, %p77
    %p79 = scmp.ne.s32.totalorder %s70, %s71
    %p80 = scmp.eq.s32.totalorder %s18, 0
    %p81 = por %p79, %p80
    %p82 = scmp.ne.s32.totalorder %s70, %s71
    %p83 = scmp.eq.s32.totalorder %s19, 2
    %p84 = por %p82, %p83
    %p86 = scmp.ne.s32.totalorder %s71, %s85
    %p87 = scmp.eq.s32.totalorder %s19, 0
    %p88 = por %p86, %p87
    %s90 = sadd.s32 %s89, 1
    %p93 = scmp.eq.s32.totalorder %s13, 2
    %p94 = scmp.ne.s32.totalorder %s89, %s91
    %p95 = scmp.eq.s32.totalorder %s13, 0
    %p96 = por %p94, %p95
    %p97 = scmp.ne.s32.totalorder %s89, %s91
    %p98 = scmp.eq.s32.totalorder %s18, 2
    %p99 = por %p97, %p98
    %p100 = scmp.ne.s32.totalorder %s91, %s92
    %p101 = scmp.eq.s32.totalorder %s18, 0
    %p102 = por %p100, %p101
    %p103 = scmp.ne.s32.totalorder %s91, %s92
    %p104 = scmp.eq.s32.totalorder %s19, 2
    %p105 = por %p103, %p104
    %p107 = scmp.ne.s32.totalorder %s92, %s106
    %p108 = scmp.eq.s32.totalorder %s19, 0
    %p109 = por %p107, %p108
    %s111 = sadd.s32 %s110, 1
    %p114 = scmp.eq.s32.totalorder %s13, 2
    %p115 = scmp.ne.s32.totalorder %s110, %s112
    %p116 = scmp.eq.s32.totalorder %s13, 0
    %p117 = por %p115, %p116
    %p118 = scmp.ne.s32.totalorder %s110, %s112
    %p119 = scmp.eq.s32.totalorder %s18, 2
    %p120 = por %p118, %p119
    %p121 = scmp.ne.s32.totalorder %s112, %s113
    %p122 = scmp.eq.s32.totalorder %s18, 0
    %p123 = por %p121, %p122
    %p124 = scmp.ne.s32.totalorder %s112, %s113
    %p125 = scmp.eq.s32.totalorder %s19, 2
    %p126 = por %p124, %p125
    %p128 = scmp.ne.s32.totalorder %s113, %s127
    %p129 = scmp.eq.s32.totalorder %s19, 0
    %p130 = por %p128, %p129
    %s132 = sadd.s32 %s131, 1
    %p135 = scmp.eq.s32.totalorder %s13, 2
    %p136 = scmp.ne.s32.totalorder %s131, %s133
    %p137 = scmp.eq.s32.totalorder %s13, 0
    %p138 = por %p136, %p137
    %p139 = scmp.ne.s32.totalorder %s131, %s133
    %p140 = scmp.eq.s32.totalorder %s18, 2
    %p141 = por %p139, %p140
    %p142 = scmp.ne.s32.totalorder %s133, %s134
    %p143 = scmp.eq.s32.totalorder %s18, 0
    %p144 = por %p142, %p143
    %p145 = scmp.ne.s32.totalorder %s133, %s134
    %p146 = scmp.eq.s32.totalorder %s19, 2
    %p147 = por %p145, %p146
    %p149 = scmp.ne.s32.totalorder %s134, %s148
    %p150 = scmp.eq.s32.totalorder %s19, 0
    %p151 = por %p149, %p150
    %s153 = sadd.s32 %s152, 1
    %p156 = scmp.eq.s32.totalorder %s13, 2
    %p157 = scmp.ne.s32.totalorder %s152, %s154
    %p158 = scmp.eq.s32.totalorder %s13, 0
    %p159 = por %p157, %p158
    %p160 = scmp.ne.s32.totalorder %s152, %s154
    %p161 = scmp.eq.s32.totalorder %s18, 2
    %p162 = por %p160, %p161
    %p163 = scmp.ne.s32.totalorder %s154, %s155
    %p164 = scmp.eq.s32.totalorder %s18, 0
    %p165 = por %p163, %p164
    %p166 = scmp.ne.s32.totalorder %s154, %s155
    %p167 = scmp.eq.s32.totalorder %s19, 2
    %p168 = por %p166, %p167
    %p170 = scmp.ne.s32.totalorder %s155, %s169
    %p171 = scmp.eq.s32.totalorder %s19, 0
    %p172 = por %p170, %p171
    %s173 = ssub.s32 %s13, %s20
    %p174 = scmp.eq.s32.totalorder %s173, 0
    %s176 = sadd.s32 %s175, 1
    %s177 = scalar_select %p174, %s175, %s176
    %p180 = pneg %p174
    %p181 = scmp.eq.s32.totalorder %s13, 2
    %p182 = por %p180, %p181
    %p183 = scmp.ne.s32.totalorder %s175, %s178
    %p184 = scmp.eq.s32.totalorder %s13, 0
    %p185 = por %p183, %p184
    %p186 = scmp.ne.s32.totalorder %s175, %s178
    %p187 = scmp.eq.s32.totalorder %s18, 2
    %p188 = por %p186, %p187
    %p189 = scmp.ne.s32.totalorder %s178, %s179
    %p190 = scmp.eq.s32.totalorder %s18, 0
    %p191 = por %p189, %p190
    %p192 = scmp.ne.s32.totalorder %s178, %s179
    %p193 = scmp.eq.s32.totalorder %s19, 2
    %p194 = por %p192, %p193
    %p196 = scmp.ne.s32.totalorder %s179, %s195
    %p197 = scmp.eq.s32.totalorder %s19, 0
    %p198 = por %p196, %p197
    %p199 = scmp.le.s32.totalorder 1, %s13
    %p200 = scmp.lt.s32.totalorder %s13, 4
    %p201 = pnand %p199, %p200
    %p202 = pneg %p201
    // Predicated region
    $region9: #{critic_forward.1} parent=5 // pred_check
      _
    $region10: #{critic_forward.1} parent=5 // pred_check_branch
      %204 = sbr.rel (%p201) target = $region12
    $region11: #{critic_forward.1} parent=5 // pred_region
      %s205 = ssub.s32 %s13, 1
      // Predicated region
      $region13: #{critic_forward.1} parent=11 // pred_check
        %p206 = pneg %p60
      $region14: #{critic_forward.1} parent=11 // pred_check_branch
        %208 = sbr.rel (%p206) target = $region16
      $region15: #{critic_forward.1} parent=11 // pred_region
        _
      $region16: #{critic_forward.1} parent=11 // pred_fallthru
        _
      // Predicated region
      $region17: #{critic_forward.1} parent=11 // pred_check
        %p209 = pneg %p81
      $region18: #{critic_forward.1} parent=11 // pred_check_branch
        %211 = sbr.rel (%p209) target = $region20
      $region19: #{critic_forward.1} parent=11 // pred_region
        _
      $region20: #{critic_forward.1} parent=11 // pred_fallthru
        _
      // Predicated region
      $region21: #{critic_forward.1} parent=11 // pred_check
        %p212 = pneg %p102
      $region22: #{critic_forward.1} parent=11 // pred_check_branch
        %214 = sbr.rel (%p212) target = $region24
      $region23: #{critic_forward.1} parent=11 // pred_region
        _
      $region24: #{critic_forward.1} parent=11 // pred_fallthru
        _
      // Predicated region
      $region25: #{critic_forward.1} parent=11 // pred_check
        %p215 = pneg %p123
      $region26: #{critic_forward.1} parent=11 // pred_check_branch
        %217 = sbr.rel (%p215) target = $region28
      $region27: #{critic_forward.1} parent=11 // pred_region
        _
      $region28: #{critic_forward.1} parent=11 // pred_fallthru
        _
      // Predicated region
      $region29: #{critic_forward.1} parent=11 // pred_check
        %p218 = pneg %p144
      $region30: #{critic_forward.1} parent=11 // pred_check_branch
        %220 = sbr.rel (%p218) target = $region32
      $region31: #{critic_forward.1} parent=11 // pred_region
        _
      $region32: #{critic_forward.1} parent=11 // pred_fallthru
        _
      // Predicated region
      $region33: #{critic_forward.1} parent=11 // pred_check
        %p221 = pneg %p165
      $region34: #{critic_forward.1} parent=11 // pred_check_branch
        %223 = sbr.rel (%p221) target = $region36
      $region35: #{critic_forward.1} parent=11 // pred_region
        _
      $region36: #{critic_forward.1} parent=11 // pred_fallthru
        _
    $region12: #{critic_forward.1} parent=5 // pred_fallthru
      _
    %p224 = scmp.lt.s32.totalorder %s13, 3
    // Predicated region
    $region37: #{critic_forward.1} parent=5 // pred_check
      %p225 = pneg %p224
    $region38: #{critic_forward.1} parent=5 // pred_check_branch
      %227 = sbr.rel (%p225) target = $region40
    $region39: #{critic_forward.1} parent=5 // pred_region
      // Predicated region
      $region41: #{critic_forward.1} parent=39 // pred_check
        %p228 = pneg %p33
      $region42: #{critic_forward.1} parent=39 // pred_check_branch
        %230 = sbr.rel (%p228) target = $region44
      $region43: #{critic_forward.1} parent=39 // pred_region
        %s231 = smul.u32 16, %s13
        %p232 = scmp.lt.s32.totalorder %s231, 47
        %s233 = scalar_select %p232, %s231, 47
        %s234 = smul.addr %s233, 4
        %s235 = scalar_lea.vmem %s0, %s234
        %s236 = smul.u32 16, %s13
      $region44: #{critic_forward.1} parent=39 // pred_fallthru
        _
    $region40: #{critic_forward.1} parent=5 // pred_fallthru
      _
    %p237 = scmp.le.s32.totalorder 1, %s13
    %p238 = scmp.lt.s32.totalorder %s13, 4
    %p239 = pnand %p237, %p238
    %p240 = pneg %p239
    // Predicated region
    $region45: #{critic_forward.1} parent=5 // pred_check
      _
    $region46: #{critic_forward.1} parent=5 // pred_check_branch
      %242 = sbr.rel (%p239) target = $region48
    $region47: #{critic_forward.1} parent=5 // pred_region
      %s243 = ssub.s32 %s13, 1
      %s244 = smul.u32 16, %s18
      %p245 = scmp.lt.s32.totalorder %s244, 47
      %s246 = scalar_select %p245, %s244, 47
      %s247 = smul.addr %s246, 4
      %s248 = scalar_lea.vmem %s0, %s247
      %p249 = pneg %p39
      %p250 = pneg %p36
      %p251 = pneg %p60
      %p252 = pneg %p57
      %p253 = pneg %p81
      %p254 = pneg %p78
      %p255 = pneg %p102
      %p256 = pneg %p99
      %p257 = pneg %p123
      %p258 = pneg %p120
      %p259 = pneg %p144
      %p260 = pneg %p141
      %p261 = pneg %p165
      %p262 = pneg %p162
      %p263 = pneg %p191
      %p264 = pneg %p188
      %s265 = smul.u32 16, %s18
      %p266 = scmp.lt.s32.totalorder %s265, 47
      %s267 = scalar_select %p266, %s265, 47
      %s268 = smul.addr %s267, 8
      %s269 = scalar_lea.vmem %s7, %s268
      %s270 = smul.u32 16, %s18
      %p271 = scmp.lt.s32.totalorder %s270, 47
      %s272 = scalar_select %p271, %s270, 47
      %s273 = smul.addr %s272, 4
      %s274 = scalar_lea.vmem %s0, %s273
      %s275 = smul.u32 16, %s18
      %s276 = smul.u32 16, %s18
      %p277 = scmp.lt.s32.totalorder %s276, 47
      %s278 = scalar_select %p277, %s276, 47
      %s279 = smul.addr %s278, 8
      %s280 = scalar_lea.vmem %s7, %s279
      %s281 = smul.u32 16, %s18
      %v283 = vld [vmem:[%s274] sm:$0xf]
      %v284 = vld [vmem:[%s274 + $0x4] sm:$0xf]
      %v285 = vld [vmem:[%s274 + $0x8] sm:$0xf]
      %v286 = vld [vmem:[%s274 + $0xc] sm:$0xf]
      %v287 = vld [vmem:[%s274 + $0x10] sm:$0xf]
      %v288 = vld [vmem:[%s274 + $0x14] sm:$0xf]
      %v289 = vld [vmem:[%s274 + $0x18] sm:$0xf]
      %v290 = vld [vmem:[%s274 + $0x1c] sm:$0xf]
      %v291 = vld [vmem:[%s274 + $0x20] sm:$0xf]
      %v292 = vld [vmem:[%s274 + $0x24] sm:$0xf]
      %v293 = vld [vmem:[%s274 + $0x28] sm:$0xf]
      %v294 = vld [vmem:[%s274 + $0x2c] sm:$0xf]
      %v295 = vld [vmem:[%s274 + $0x30] sm:$0xf]
      %v296 = vld [vmem:[%s274 + $0x34] sm:$0xf]
      %v297 = vld [vmem:[%s274 + $0x38] sm:$0xf]
      %v298 = vld [vmem:[%s274 + $0x3c] sm:$0xf]
      %v299 = vld [vmem:[%s1] sm:$0xff]
      %v300 = vld [vmem:[%s1 + $0x8] sm:$0xff]
      %v301 = vld [vmem:[%s1 + $0x10] sm:$0xff]
      %v302 = vld [vmem:[%s1 + $0x18] sm:$0xff]
      %v303 = vld [vmem:[%s1 + $0x20] sm:$0xff]
      %v304 = vld [vmem:[%s1 + $0x28] sm:$0xff]
      %v305 = vld [vmem:[%s1 + $0x30] sm:$0xff]
      %v306 = vld [vmem:[%s1 + $0x38] sm:$0xff]
      %v307 = vld [vmem:[%s1 + $0x40] sm:$0xff]
      %v308 = vld [vmem:[%s1 + $0x48] sm:$0xff]
      %v309 = vld [vmem:[%s1 + $0x50] sm:$0xff]
      %v310 = vld [vmem:[%s1 + $0x58] sm:$0xff]
      %v311 = vld [vmem:[%s1 + $0x60] sm:$0xff]
      %v312 = vld [vmem:[%s1 + $0x68] sm:$0xff]
      %v313 = vld [vmem:[%s1 + $0x70] sm:$0xff]
      %v314 = vld [vmem:[%s1 + $0x78] sm:$0xff]
      %v315 = vld [vmem:[%s1 + $0x80] sm:$0xff]
      %v316 = vld [vmem:[%s1 + $0x88] sm:$0xff]
      %v317 = vld [vmem:[%s1 + $0x90] sm:$0xff]
      %v318 = vld [vmem:[%s1 + $0x98] sm:$0xff]
      %v319 = vld [vmem:[%s1 + $0xa0] sm:$0xff]
      %v320 = vld [vmem:[%s1 + $0xa8] sm:$0xff]
      %v321 = vld [vmem:[%s1 + $0xb0] sm:$0xff]
      %v322 = vld [vmem:[%s1 + $0xb8] sm:$0xff]
      %v323 = vld [vmem:[%s1 + $0xc0] sm:$0xff]
      %v324 = vld [vmem:[%s1 + $0xc8] sm:$0xff]
      %v325 = vld [vmem:[%s1 + $0xd0] sm:$0xff]
      %v326 = vld [vmem:[%s1 + $0xd8] sm:$0xff]
      %v327 = vld [vmem:[%s1 + $0xe0] sm:$0xff]
      %v328 = vld [vmem:[%s1 + $0xe8] sm:$0xff]
      %v329 = vld [vmem:[%s1 + $0xf0] sm:$0xff]
      %v330 = vld [vmem:[%s1 + $0xf8] sm:$0xff]
      %v331 = vld [vmem:[%s2] sm:$0xf]
      %v333 = vlaneseq
      %v334 = vshrl.u32 %v333, 7
      %v335 = vsub.s32 0, %v334
      %v336 = vrot.slane %v331, %v335
      %v337 = vlaneseq
      %v338 = vshrl.u32 %v337, 7
      %v339 = vsub.s32 1, %v338
      %v340 = vrot.slane %v331, %v339
      %v341 = vlaneseq
      %v342 = vshrl.u32 %v341, 7
      %v343 = vsub.s32 2, %v342
      %v344 = vrot.slane %v331, %v343
      %v345 = vlaneseq
      %v346 = vshrl.u32 %v345, 7
      %v347 = vsub.s32 3, %v346
      %v348 = vrot.slane %v331, %v347
      %v369 = vunpack.c.l.b16 %v283
      %v370 = vunpack.c.l.b16 %v284
      %v371 = vunpack.c.l.b16 %v285
      %v372 = vunpack.c.l.b16 %v286
      %v373 = vunpack.c.l.b16 %v287
      %v374 = vunpack.c.l.b16 %v288
      %v375 = vunpack.c.l.b16 %v289
      %v376 = vunpack.c.l.b16 %v290
      %v377 = vunpack.c.l.b16 %v291
      %v378 = vunpack.c.l.b16 %v292
      %v379 = vunpack.c.l.b16 %v293
      %v380 = vunpack.c.l.b16 %v294
      %v381 = vunpack.c.l.b16 %v295
      %v382 = vunpack.c.l.b16 %v296
      %v383 = vunpack.c.l.b16 %v297
      %v384 = vunpack.c.l.b16 %v298
      %v385 = vpack.c.b16 %v370, %v369
      %v386 = vpack.c.b16 %v372, %v371
      %v387 = vpack.c.b16 %v374, %v373
      %v388 = vpack.c.b16 %v376, %v375
      %v389 = vpack.c.b16 %v378, %v377
      %v390 = vpack.c.b16 %v380, %v379
      %v391 = vpack.c.b16 %v382, %v381
      %v392 = vpack.c.b16 %v384, %v383
      %v433 = vunpack.c.l.b16 %v299
      %v434 = vunpack.c.h.b16 %v299
      %v435 = vunpack.c.l.b16 %v300
      %v436 = vunpack.c.h.b16 %v300
      %v437 = vunpack.c.l.b16 %v301
      %v438 = vunpack.c.h.b16 %v301
      %v439 = vunpack.c.l.b16 %v302
      %v440 = vunpack.c.h.b16 %v302
      %v441 = vunpack.c.l.b16 %v303
      %v442 = vunpack.c.h.b16 %v303
      %v443 = vunpack.c.l.b16 %v304
      %v444 = vunpack.c.h.b16 %v304
      %v445 = vunpack.c.l.b16 %v305
      %v446 = vunpack.c.h.b16 %v305
      %v447 = vunpack.c.l.b16 %v306
      %v448 = vunpack.c.h.b16 %v306
      %v449 = vunpack.c.l.b16 %v307
      %v450 = vunpack.c.h.b16 %v307
      %v451 = vunpack.c.l.b16 %v308
      %v452 = vunpack.c.h.b16 %v308
      %v453 = vunpack.c.l.b16 %v309
      %v454 = vunpack.c.h.b16 %v309
      %v455 = vunpack.c.l.b16 %v310
      %v456 = vunpack.c.h.b16 %v310
      %v457 = vunpack.c.l.b16 %v311
      %v458 = vunpack.c.h.b16 %v311
      %v459 = vunpack.c.l.b16 %v312
      %v460 = vunpack.c.h.b16 %v312
      %v461 = vunpack.c.l.b16 %v313
      %v462 = vunpack.c.h.b16 %v313
      %v463 = vunpack.c.l.b16 %v314
      %v464 = vunpack.c.h.b16 %v314
      %v465 = vunpack.c.l.b16 %v315
      %v466 = vunpack.c.h.b16 %v315
      %v467 = vunpack.c.l.b16 %v316
      %v468 = vunpack.c.h.b16 %v316
      %v469 = vunpack.c.l.b16 %v317
      %v470 = vunpack.c.h.b16 %v317
      %v471 = vunpack.c.l.b16 %v318
      %v472 = vunpack.c.h.b16 %v318
      %v473 = vunpack.c.l.b16 %v319
      %v474 = vunpack.c.h.b16 %v319
      %v475 = vunpack.c.l.b16 %v320
      %v476 = vunpack.c.h.b16 %v320
      %v477 = vunpack.c.l.b16 %v321
      %v478 = vunpack.c.h.b16 %v321
      %v479 = vunpack.c.l.b16 %v322
      %v480 = vunpack.c.h.b16 %v322
      %v481 = vunpack.c.l.b16 %v323
      %v482 = vunpack.c.h.b16 %v323
      %v483 = vunpack.c.l.b16 %v324
      %v484 = vunpack.c.h.b16 %v324
      %v485 = vunpack.c.l.b16 %v325
      %v486 = vunpack.c.h.b16 %v325
      %v487 = vunpack.c.l.b16 %v326
      %v488 = vunpack.c.h.b16 %v326
      %v489 = vunpack.c.l.b16 %v327
      %v490 = vunpack.c.h.b16 %v327
      %v491 = vunpack.c.l.b16 %v328
      %v492 = vunpack.c.h.b16 %v328
      %v493 = vunpack.c.l.b16 %v329
      %v494 = vunpack.c.h.b16 %v329
      %v495 = vunpack.c.l.b16 %v330
      %v496 = vunpack.c.h.b16 %v330
      %v497 = vpack.c.b16 %v437, %v433
      %v498 = vpack.c.b16 %v438, %v434
      %v499 = vpack.c.b16 %v439, %v435
      %v500 = vpack.c.b16 %v440, %v436
      %v501 = vpack.c.b16 %v445, %v441
      %v502 = vpack.c.b16 %v446, %v442
      %v503 = vpack.c.b16 %v447, %v443
      %v504 = vpack.c.b16 %v448, %v444
      %v505 = vpack.c.b16 %v453, %v449
      %v506 = vpack.c.b16 %v454, %v450
      %v507 = vpack.c.b16 %v455, %v451
      %v508 = vpack.c.b16 %v456, %v452
      %v509 = vpack.c.b16 %v461, %v457
      %v510 = vpack.c.b16 %v462, %v458
      %v511 = vpack.c.b16 %v463, %v459
      %v512 = vpack.c.b16 %v464, %v460
      %v513 = vpack.c.b16 %v469, %v465
      %v514 = vpack.c.b16 %v470, %v466
      %v515 = vpack.c.b16 %v471, %v467
      %v516 = vpack.c.b16 %v472, %v468
      %v517 = vpack.c.b16 %v477, %v473
      %v518 = vpack.c.b16 %v478, %v474
      %v519 = vpack.c.b16 %v479, %v475
      %v520 = vpack.c.b16 %v480, %v476
      %v521 = vpack.c.b16 %v485, %v481
      %v522 = vpack.c.b16 %v486, %v482
      %v523 = vpack.c.b16 %v487, %v483
      %v524 = vpack.c.b16 %v488, %v484
      %v525 = vpack.c.b16 %v493, %v489
      %v526 = vpack.c.b16 %v494, %v490
      %v527 = vpack.c.b16 %v495, %v491
      %v528 = vpack.c.b16 %v496, %v492
      %561 = vmatprep.subr.bf16.mxu0 %v498
      %562 = vmatpush1.bf16.msra.mxu0 %v497
      %563 = vmatprep.subr.bf16.mxu0 %v502
      %564 = vmatpush1.bf16.msra.mxu0 %v501
      %565 = vmatprep.subr.bf16.mxu0 %v506
      %566 = vmatpush1.bf16.msra.mxu0 %v505
      %567 = vmatprep.subr.bf16.mxu0 %v510
      %568 = vmatpush1.bf16.msra.mxu0 %v509
      %569 = vmatprep.subr.bf16.mxu0 %v514
      %570 = vmatpush1.bf16.msra.mxu0 %v513
      %571 = vmatprep.subr.bf16.mxu0 %v518
      %572 = vmatpush1.bf16.msra.mxu0 %v517
      %573 = vmatprep.subr.bf16.mxu0 %v522
      %574 = vmatpush1.bf16.msra.mxu0 %v521
      %575 = vmatprep.subr.bf16.mxu0 %v526
      %576 = vmatpush1.bf16.msra.mxu0 %v525
      %577 = vmatprep.subr.bf16.mxu0 0
      %578 = vmatpush1.bf16.msra.mxu0 0
      %579 = vmatprep.subr.bf16.mxu0 0
      %580 = vmatpush1.bf16.msra.mxu0 0
      %581 = vmatprep.subr.bf16.mxu0 0
      %582 = vmatpush1.bf16.msra.mxu0 0
      %583 = vmatprep.subr.bf16.mxu0 0
      %584 = vmatpush1.bf16.msra.mxu0 0
      %585 = vmatprep.subr.bf16.mxu0 0
      %586 = vmatpush1.bf16.msra.mxu0 0
      %587 = vmatprep.subr.bf16.mxu0 0
      %588 = vmatpush1.bf16.msra.mxu0 0
      %589 = vmatprep.subr.bf16.mxu0 0
      %590 = vmatpush1.bf16.msra.mxu0 0
      %591 = vmatprep.subr.bf16.mxu0 0
      %592 = vmatpush1.bf16.msra.mxu0 0
      %593 = vmatprep.mubr.bf16.mxu0 0
      %594 = vmatmul.mubr.bf16.gmra.mrb[0].mxu0 %v385
      %v595 = vpop.f32.mrb[0].mxu0
      %v596 = vadd.f32 %v336, %v595
      %v597 = vpop.f32.mrb[0].mxu0
      %v598 = vadd.f32 %v340, %v597
      %v599 = vpop.f32.mrb[0].mxu0
      %v600 = vadd.f32 %v336, %v599
      %v601 = vpop.f32.mrb[0].mxu0
      %v602 = vadd.f32 %v340, %v601
      %603 = vmatprep.mubr.bf16.mxu0 0
      %604 = vmatmul.mubr.bf16.gmra.mrb[0].mxu0 %v386
      %v605 = vpop.f32.mrb[0].mxu0
      %v606 = vadd.f32 %v336, %v605
      %v607 = vpop.f32.mrb[0].mxu0
      %v608 = vadd.f32 %v340, %v607
      %v609 = vpop.f32.mrb[0].mxu0
      %v610 = vadd.f32 %v336, %v609
      %v611 = vpop.f32.mrb[0].mxu0
      %v612 = vadd.f32 %v340, %v611
      %613 = vmatprep.mubr.bf16.mxu0 0
      %614 = vmatmul.mubr.bf16.gmra.mrb[0].mxu0 %v387
      %v615 = vpop.f32.mrb[0].mxu0
      %v616 = vadd.f32 %v336, %v615
      %v617 = vpop.f32.mrb[0].mxu0
      %v618 = vadd.f32 %v340, %v617
      %v619 = vpop.f32.mrb[0].mxu0
      %v620 = vadd.f32 %v336, %v619
      %v621 = vpop.f32.mrb[0].mxu0
      %v622 = vadd.f32 %v340, %v621
      %623 = vmatprep.mubr.bf16.mxu0 0
      %624 = vmatmul.mubr.bf16.gmra.mrb[0].mxu0 %v388
      %v625 = vpop.f32.mrb[0].mxu0
      %v626 = vadd.f32 %v336, %v625
      %v627 = vpop.f32.mrb[0].mxu0
      %v628 = vadd.f32 %v340, %v627
      %v629 = vpop.f32.mrb[0].mxu0
      %v630 = vadd.f32 %v336, %v629
      %v631 = vpop.f32.mrb[0].mxu0
      %v632 = vadd.f32 %v340, %v631
      %633 = vmatprep.mubr.bf16.mxu0 0
      %634 = vmatmul.mubr.bf16.gmra.mrb[0].mxu0 %v389
      %v635 = vpop.f32.mrb[0].mxu0
      %v636 = vadd.f32 %v336, %v635
      %v637 = vpop.f32.mrb[0].mxu0
      %v638 = vadd.f32 %v340, %v637
      %v639 = vpop.f32.mrb[0].mxu0
      %v640 = vadd.f32 %v336, %v639
      %v641 = vpop.f32.mrb[0].mxu0
      %v642 = vadd.f32 %v340, %v641
      %643 = vmatprep.mubr.bf16.mxu0 0
      %644 = vmatmul.mubr.bf16.gmra.mrb[0].mxu0 %v390
      %v645 = vpop.f32.mrb[0].mxu0
      %v646 = vadd.f32 %v336, %v645
      %v647 = vpop.f32.mrb[0].mxu0
      %v648 = vadd.f32 %v340, %v647
      %v649 = vpop.f32.mrb[0].mxu0
      %v650 = vadd.f32 %v336, %v649
      %v651 = vpop.f32.mrb[0].mxu0
      %v652 = vadd.f32 %v340, %v651
      %653 = vmatprep.mubr.bf16.mxu0 0
      %654 = vmatmul.mubr.bf16.gmra.mrb[0].mxu0 %v391
      %v655 = vpop.f32.mrb[0].mxu0
      %v656 = vadd.f32 %v336, %v655
      %v657 = vpop.f32.mrb[0].mxu0
      %v658 = vadd.f32 %v340, %v657
      %v659 = vpop.f32.mrb[0].mxu0
      %v660 = vadd.f32 %v336, %v659
      %v661 = vpop.f32.mrb[0].mxu0
      %v662 = vadd.f32 %v340, %v661
      %663 = vmatprep.mubr.bf16.mxu0 0
      %664 = vmatmul.mubr.bf16.gmra.mrb[0].mxu0 %v392
      %v665 = vpop.f32.mrb[0].mxu0
      %v666 = vadd.f32 %v336, %v665
      %v667 = vpop.f32.mrb[0].mxu0
      %v668 = vadd.f32 %v340, %v667
      %v669 = vpop.f32.mrb[0].mxu0
      %v670 = vadd.f32 %v336, %v669
      %v671 = vpop.f32.mrb[0].mxu0
      %v672 = vadd.f32 %v340, %v671
      %673 = vdwg.mxu0
      %674 = vmatprep.subr.bf16.mxu0 %v500
      %675 = vmatpush1.bf16.msra.mxu0 %v499
      %676 = vmatprep.subr.bf16.mxu0 %v504
      %677 = vmatpush1.bf16.msra.mxu0 %v503
      %678 = vmatprep.subr.bf16.mxu0 %v508
      %679 = vmatpush1.bf16.msra.mxu0 %v507
      %680 = vmatprep.subr.bf16.mxu0 %v512
      %681 = vmatpush1.bf16.msra.mxu0 %v511
      %682 = vmatprep.subr.bf16.mxu0 %v516
      %683 = vmatpush1.bf16.msra.mxu0 %v515
      %684 = vmatprep.subr.bf16.mxu0 %v520
      %685 = vmatpush1.bf16.msra.mxu0 %v519
      %686 = vmatprep.subr.bf16.mxu0 %v524
      %687 = vmatpush1.bf16.msra.mxu0 %v523
      %688 = vmatprep.subr.bf16.mxu0 %v528
      %689 = vmatpush1.bf16.msra.mxu0 %v527
      %690 = vmatprep.subr.bf16.mxu0 0
      %691 = vmatpush1.bf16.msra.mxu0 0
      %692 = vmatprep.subr.bf16.mxu0 0
      %693 = vmatpush1.bf16.msra.mxu0 0
      %694 = vmatprep.subr.bf16.mxu0 0
      %695 = vmatpush1.bf16.msra.mxu0 0
      %696 = vmatprep.subr.bf16.mxu0 0
      %697 = vmatpush1.bf16.msra.mxu0 0
      %698 = vmatprep.subr.bf16.mxu0 0
      %699 = vmatpush1.bf16.msra.mxu0 0
      %700 = vmatprep.subr.bf16.mxu0 0
      %701 = vmatpush1.bf16.msra.mxu0 0
      %702 = vmatprep.subr.bf16.mxu0 0
      %703 = vmatpush1.bf16.msra.mxu0 0
      %704 = vmatprep.subr.bf16.mxu0 0
      %705 = vmatpush1.bf16.msra.mxu0 0
      %706 = vmatprep.mubr.bf16.mxu0 0
      %707 = vmatmul.mubr.bf16.gmra.mrb[0].mxu0 %v385
      %v708 = vpop.f32.mrb[0].mxu0
      %v709 = vadd.f32 %v344, %v708
      %v710 = vpop.f32.mrb[0].mxu0
      %v711 = vadd.f32 %v348, %v710
      %v712 = vpop.f32.mrb[0].mxu0
      %v713 = vadd.f32 %v344, %v712
      %v714 = vpop.f32.mrb[0].mxu0
      %v715 = vadd.f32 %v348, %v714
      %716 = vmatprep.mubr.bf16.mxu0 0
      %717 = vmatmul.mubr.bf16.gmra.mrb[0].mxu0 %v386
      %v718 = vpop.f32.mrb[0].mxu0
      %v719 = vadd.f32 %v344, %v718
      %v720 = vpop.f32.mrb[0].mxu0
      %v721 = vadd.f32 %v348, %v720
      %v722 = vpop.f32.mrb[0].mxu0
      %v723 = vadd.f32 %v344, %v722
      %v724 = vpop.f32.mrb[0].mxu0
      %v725 = vadd.f32 %v348, %v724
      %726 = vmatprep.mubr.bf16.mxu0 0
      %727 = vmatmul.mubr.bf16.gmra.mrb[0].mxu0 %v387
      %v728 = vpop.f32.mrb[0].mxu0
      %v729 = vadd.f32 %v344, %v728
      %v730 = vpop.f32.mrb[0].mxu0
      %v731 = vadd.f32 %v348, %v730
      %v732 = vpop.f32.mrb[0].mxu0
      %v733 = vadd.f32 %v344, %v732
      %v734 = vpop.f32.mrb[0].mxu0
      %v735 = vadd.f32 %v348, %v734
      %736 = vmatprep.mubr.bf16.mxu0 0
      %737 = vmatmul.mubr.bf16.gmra.mrb[0].mxu0 %v388
      %v738 = vpop.f32.mrb[0].mxu0
      %v739 = vadd.f32 %v344, %v738
      %v740 = vpop.f32.mrb[0].mxu0
      %v741 = vadd.f32 %v348, %v740
      %v742 = vpop.f32.mrb[0].mxu0
      %v743 = vadd.f32 %v344, %v742
      %v744 = vpop.f32.mrb[0].mxu0
      %v745 = vadd.f32 %v348, %v744
      %746 = vmatprep.mubr.bf16.mxu0 0
      %747 = vmatmul.mubr.bf16.gmra.mrb[0].mxu0 %v389
      %v748 = vpop.f32.mrb[0].mxu0
      %v749 = vadd.f32 %v344, %v748
      %v750 = vpop.f32.mrb[0].mxu0
      %v751 = vadd.f32 %v348, %v750
      %v752 = vpop.f32.mrb[0].mxu0
      %v753 = vadd.f32 %v344, %v752
      %v754 = vpop.f32.mrb[0].mxu0
      %v755 = vadd.f32 %v348, %v754
      %756 = vmatprep.mubr.bf16.mxu0 0
      %757 = vmatmul.mubr.bf16.gmra.mrb[0].mxu0 %v390
      %v758 = vpop.f32.mrb[0].mxu0
      %v759 = vadd.f32 %v344, %v758
      %v760 = vpop.f32.mrb[0].mxu0
      %v761 = vadd.f32 %v348, %v760
      %v762 = vpop.f32.mrb[0].mxu0
      %v763 = vadd.f32 %v344, %v762
      %v764 = vpop.f32.mrb[0].mxu0
      %v765 = vadd.f32 %v348, %v764
      %766 = vmatprep.mubr.bf16.mxu0 0
      %767 = vmatmul.mubr.bf16.gmra.mrb[0].mxu0 %v391
      %v768 = vpop.f32.mrb[0].mxu0
      %v769 = vadd.f32 %v344, %v768
      %v770 = vpop.f32.mrb[0].mxu0
      %v771 = vadd.f32 %v348, %v770
      %v772 = vpop.f32.mrb[0].mxu0
      %v773 = vadd.f32 %v344, %v772
      %v774 = vpop.f32.mrb[0].mxu0
      %v775 = vadd.f32 %v348, %v774
      %776 = vmatprep.mubr.bf16.mxu0 0
      %777 = vmatmul.mubr.bf16.gmra.mrb[0].mxu0 %v392
      %v778 = vpop.f32.mrb[0].mxu0
      %v779 = vadd.f32 %v344, %v778
      %v780 = vpop.f32.mrb[0].mxu0
      %v781 = vadd.f32 %v348, %v780
      %v782 = vpop.f32.mrb[0].mxu0
      %v783 = vadd.f32 %v344, %v782
      %v784 = vpop.f32.mrb[0].mxu0
      %v785 = vadd.f32 %v348, %v784
      %786 = vdwg.mxu0
      %v787 = vpack.c.bf16 %v600, %v596
      %v788 = vpack.c.bf16 %v602, %v598
      %v789 = vpack.c.bf16 %v713, %v709
      %v790 = vpack.c.bf16 %v715, %v711
      %v791 = vpack.c.bf16 %v610, %v606
      %v792 = vpack.c.bf16 %v612, %v608
      %v793 = vpack.c.bf16 %v723, %v719
      %v794 = vpack.c.bf16 %v725, %v721
      %v795 = vpack.c.bf16 %v620, %v616
      %v796 = vpack.c.bf16 %v622, %v618
      %v797 = vpack.c.bf16 %v733, %v729
      %v798 = vpack.c.bf16 %v735, %v731
      %v799 = vpack.c.bf16 %v630, %v626
      %v800 = vpack.c.bf16 %v632, %v628
      %v801 = vpack.c.bf16 %v743, %v739
      %v802 = vpack.c.bf16 %v745, %v741
      %v803 = vpack.c.bf16 %v640, %v636
      %v804 = vpack.c.bf16 %v642, %v638
      %v805 = vpack.c.bf16 %v753, %v749
      %v806 = vpack.c.bf16 %v755, %v751
      %v807 = vpack.c.bf16 %v650, %v646
      %v808 = vpack.c.bf16 %v652, %v648
      %v809 = vpack.c.bf16 %v763, %v759
      %v810 = vpack.c.bf16 %v765, %v761
      %v811 = vpack.c.bf16 %v660, %v656
      %v812 = vpack.c.bf16 %v662, %v658
      %v813 = vpack.c.bf16 %v773, %v769
      %v814 = vpack.c.bf16 %v775, %v771
      %v815 = vpack.c.bf16 %v670, %v666
      %v816 = vpack.c.bf16 %v672, %v668
      %v817 = vpack.c.bf16 %v783, %v779
      %v818 = vpack.c.bf16 %v785, %v781
      %v819 = vtanh.bf16.pop %v787
      %v820 = vtanh.bf16.pop %v788
      %v821 = vtanh.bf16.pop %v789
      %v822 = vtanh.bf16.pop %v790
      %v823 = vtanh.bf16.pop %v791
      %v824 = vtanh.bf16.pop %v792
      %v825 = vtanh.bf16.pop %v793
      %v826 = vtanh.bf16.pop %v794
      %v827 = vtanh.bf16.pop %v795
      %v828 = vtanh.bf16.pop %v796
      %v829 = vtanh.bf16.pop %v797
      %v830 = vtanh.bf16.pop %v798
      %v831 = vtanh.bf16.pop %v799
      %v832 = vtanh.bf16.pop %v800
      %v833 = vtanh.bf16.pop %v801
      %v834 = vtanh.bf16.pop %v802
      %v835 = vtanh.bf16.pop %v803
      %v836 = vtanh.bf16.pop %v804
      %v837 = vtanh.bf16.pop %v805
      %v838 = vtanh.bf16.pop %v806
      %v839 = vtanh.bf16.pop %v807
      %v840 = vtanh.bf16.pop %v808
      %v841 = vtanh.bf16.pop %v809
      %v842 = vtanh.bf16.pop %v810
      %v843 = vtanh.bf16.pop %v811
      %v844 = vtanh.bf16.pop %v812
      %v845 = vtanh.bf16.pop %v813
      %v846 = vtanh.bf16.pop %v814
      %v847 = vtanh.bf16.pop %v815
      %v848 = vtanh.bf16.pop %v816
      %v849 = vtanh.bf16.pop %v817
      %v850 = vtanh.bf16.pop %v818
      %v851 = vld [vmem:[%s3] sm:$0xff]
      %v852 = vld [vmem:[%s3 + $0x8] sm:$0xff]
      %v853 = vld [vmem:[%s3 + $0x10] sm:$0xff]
      %v854 = vld [vmem:[%s3 + $0x18] sm:$0xff]
      %v855 = vld [vmem:[%s3 + $0x20] sm:$0xff]
      %v856 = vld [vmem:[%s3 + $0x28] sm:$0xff]
      %v857 = vld [vmem:[%s3 + $0x30] sm:$0xff]
      %v858 = vld [vmem:[%s3 + $0x38] sm:$0xff]
      %v859 = vld [vmem:[%s3 + $0x40] sm:$0xff]
      %v860 = vld [vmem:[%s3 + $0x48] sm:$0xff]
      %v861 = vld [vmem:[%s3 + $0x50] sm:$0xff]
      %v862 = vld [vmem:[%s3 + $0x58] sm:$0xff]
      %v863 = vld [vmem:[%s3 + $0x60] sm:$0xff]
      %v864 = vld [vmem:[%s3 + $0x68] sm:$0xff]
      %v865 = vld [vmem:[%s3 + $0x70] sm:$0xff]
      %v866 = vld [vmem:[%s3 + $0x78] sm:$0xff]
      %v867 = vld [vmem:[%s3 + $0x80] sm:$0xff]
      %v868 = vld [vmem:[%s3 + $0x88] sm:$0xff]
      %v869 = vld [vmem:[%s3 + $0x90] sm:$0xff]
      %v870 = vld [vmem:[%s3 + $0x98] sm:$0xff]
      %v871 = vld [vmem:[%s3 + $0xa0] sm:$0xff]
      %v872 = vld [vmem:[%s3 + $0xa8] sm:$0xff]
      %v873 = vld [vmem:[%s3 + $0xb0] sm:$0xff]
      %v874 = vld [vmem:[%s3 + $0xb8] sm:$0xff]
      %v875 = vld [vmem:[%s3 + $0xc0] sm:$0xff]
      %v876 = vld [vmem:[%s3 + $0xc8] sm:$0xff]
      %v877 = vld [vmem:[%s3 + $0xd0] sm:$0xff]
      %v878 = vld [vmem:[%s3 + $0xd8] sm:$0xff]
      %v879 = vld [vmem:[%s3 + $0xe0] sm:$0xff]
      %v880 = vld [vmem:[%s3 + $0xe8] sm:$0xff]
      %v881 = vld [vmem:[%s3 + $0xf0] sm:$0xff]
      %v882 = vld [vmem:[%s3 + $0xf8] sm:$0xff]
      %v883 = vld [vmem:[%s3 + $0x100] sm:$0xff]
      %v884 = vld [vmem:[%s3 + $0x108] sm:$0xff]
      %v885 = vld [vmem:[%s3 + $0x110] sm:$0xff]
      %v886 = vld [vmem:[%s3 + $0x118] sm:$0xff]
      %v887 = vld [vmem:[%s3 + $0x120] sm:$0xff]
      %v888 = vld [vmem:[%s3 + $0x128] sm:$0xff]
      %v889 = vld [vmem:[%s3 + $0x130] sm:$0xff]
      %v890 = vld [vmem:[%s3 + $0x138] sm:$0xff]
      %v891 = vld [vmem:[%s3 + $0x140] sm:$0xff]
      %v892 = vld [vmem:[%s3 + $0x148] sm:$0xff]
      %v893 = vld [vmem:[%s3 + $0x150] sm:$0xff]
      %v894 = vld [vmem:[%s3 + $0x158] sm:$0xff]
      %v895 = vld [vmem:[%s3 + $0x160] sm:$0xff]
      %v896 = vld [vmem:[%s3 + $0x168] sm:$0xff]
      %v897 = vld [vmem:[%s3 + $0x170] sm:$0xff]
      %v898 = vld [vmem:[%s3 + $0x178] sm:$0xff]
      %v899 = vld [vmem:[%s3 + $0x180] sm:$0xff]
      %v900 = vld [vmem:[%s3 + $0x188] sm:$0xff]
      %v901 = vld [vmem:[%s3 + $0x190] sm:$0xff]
      %v902 = vld [vmem:[%s3 + $0x198] sm:$0xff]
      %v903 = vld [vmem:[%s3 + $0x1a0] sm:$0xff]
      %v904 = vld [vmem:[%s3 + $0x1a8] sm:$0xff]
      %v905 = vld [vmem:[%s3 + $0x1b0] sm:$0xff]
      %v906 = vld [vmem:[%s3 + $0x1b8] sm:$0xff]
      %v907 = vld [vmem:[%s3 + $0x1c0] sm:$0xff]
      %v908 = vld [vmem:[%s3 + $0x1c8] sm:$0xff]
      %v909 = vld [vmem:[%s3 + $0x1d0] sm:$0xff]
      %v910 = vld [vmem:[%s3 + $0x1d8] sm:$0xff]
      %v911 = vld [vmem:[%s3 + $0x1e0] sm:$0xff]
      %v912 = vld [vmem:[%s3 + $0x1e8] sm:$0xff]
      %v913 = vld [vmem:[%s3 + $0x1f0] sm:$0xff]
      %v914 = vld [vmem:[%s3 + $0x1f8] sm:$0xff]
      %v915 = vld [vmem:[%s3 + $0x200] sm:$0xff]
      %v916 = vld [vmem:[%s3 + $0x208] sm:$0xff]
      %v917 = vld [vmem:[%s3 + $0x210] sm:$0xff]
      %v918 = vld [vmem:[%s3 + $0x218] sm:$0xff]
      %v919 = vld [vmem:[%s3 + $0x220] sm:$0xff]
      %v920 = vld [vmem:[%s3 + $0x228] sm:$0xff]
      %v921 = vld [vmem:[%s3 + $0x230] sm:$0xff]
      %v922 = vld [vmem:[%s3 + $0x238] sm:$0xff]
      %v923 = vld [vmem:[%s3 + $0x240] sm:$0xff]
      %v924 = vld [vmem:[%s3 + $0x248] sm:$0xff]
      %v925 = vld [vmem:[%s3 + $0x250] sm:$0xff]
      %v926 = vld [vmem:[%s3 + $0x258] sm:$0xff]
      %v927 = vld [vmem:[%s3 + $0x260] sm:$0xff]
      %v928 = vld [vmem:[%s3 + $0x268] sm:$0xff]
      %v929 = vld [vmem:[%s3 + $0x270] sm:$0xff]
      %v930 = vld [vmem:[%s3 + $0x278] sm:$0xff]
      %v931 = vld [vmem:[%s3 + $0x280] sm:$0xff]
      %v932 = vld [vmem:[%s3 + $0x288] sm:$0xff]
      %v933 = vld [vmem:[%s3 + $0x290] sm:$0xff]
      %v934 = vld [vmem:[%s3 + $0x298] sm:$0xff]
      %v935 = vld [vmem:[%s3 + $0x2a0] sm:$0xff]
      %v936 = vld [vmem:[%s3 + $0x2a8] sm:$0xff]
      %v937 = vld [vmem:[%s3 + $0x2b0] sm:$0xff]
      %v938 = vld [vmem:[%s3 + $0x2b8] sm:$0xff]
      %v939 = vld [vmem:[%s3 + $0x2c0] sm:$0xff]
      %v940 = vld [vmem:[%s3 + $0x2c8] sm:$0xff]
      %v941 = vld [vmem:[%s3 + $0x2d0] sm:$0xff]
      %v942 = vld [vmem:[%s3 + $0x2d8] sm:$0xff]
      %v943 = vld [vmem:[%s3 + $0x2e0] sm:$0xff]
      %v944 = vld [vmem:[%s3 + $0x2e8] sm:$0xff]
      %v945 = vld [vmem:[%s3 + $0x2f0] sm:$0xff]
      %v946 = vld [vmem:[%s3 + $0x2f8] sm:$0xff]
      %v947 = vld [vmem:[%s3 + $0x300] sm:$0xff]
      %v948 = vld [vmem:[%s3 + $0x308] sm:$0xff]
      %v949 = vld [vmem:[%s3 + $0x310] sm:$0xff]
      %v950 = vld [vmem:[%s3 + $0x318] sm:$0xff]
      %v951 = vld [vmem:[%s3 + $0x320] sm:$0xff]
      %v952 = vld [vmem:[%s3 + $0x328] sm:$0xff]
      %v953 = vld [vmem:[%s3 + $0x330] sm:$0xff]
      %v954 = vld [vmem:[%s3 + $0x338] sm:$0xff]
      %v955 = vld [vmem:[%s3 + $0x340] sm:$0xff]
      %v956 = vld [vmem:[%s3 + $0x348] sm:$0xff]
      %v957 = vld [vmem:[%s3 + $0x350] sm:$0xff]
      %v958 = vld [vmem:[%s3 + $0x358] sm:$0xff]
      %v959 = vld [vmem:[%s3 + $0x360] sm:$0xff]
      %v960 = vld [vmem:[%s3 + $0x368] sm:$0xff]
      %v961 = vld [vmem:[%s3 + $0x370] sm:$0xff]
      %v962 = vld [vmem:[%s3 + $0x378] sm:$0xff]
      %v963 = vld [vmem:[%s3 + $0x380] sm:$0xff]
      %v964 = vld [vmem:[%s3 + $0x388] sm:$0xff]
      %v965 = vld [vmem:[%s3 + $0x390] sm:$0xff]
      %v966 = vld [vmem:[%s3 + $0x398] sm:$0xff]
      %v967 = vld [vmem:[%s3 + $0x3a0] sm:$0xff]
      %v968 = vld [vmem:[%s3 + $0x3a8] sm:$0xff]
      %v969 = vld [vmem:[%s3 + $0x3b0] sm:$0xff]
      %v970 = vld [vmem:[%s3 + $0x3b8] sm:$0xff]
      %v971 = vld [vmem:[%s3 + $0x3c0] sm:$0xff]
      %v972 = vld [vmem:[%s3 + $0x3c8] sm:$0xff]
      %v973 = vld [vmem:[%s3 + $0x3d0] sm:$0xff]
      %v974 = vld [vmem:[%s3 + $0x3d8] sm:$0xff]
      %v975 = vld [vmem:[%s3 + $0x3e0] sm:$0xff]
      %v976 = vld [vmem:[%s3 + $0x3e8] sm:$0xff]
      %v977 = vld [vmem:[%s3 + $0x3f0] sm:$0xff]
      %v978 = vld [vmem:[%s3 + $0x3f8] sm:$0xff]
      %v979 = vld [vmem:[%s4] sm:$0xf]
      %v981 = vlaneseq
      %v982 = vshrl.u32 %v981, 7
      %v983 = vsub.s32 0, %v982
      %v984 = vrot.slane %v979, %v983
      %v985 = vlaneseq
      %v986 = vshrl.u32 %v985, 7
      %v987 = vsub.s32 1, %v986
      %v988 = vrot.slane %v979, %v987
      %v989 = vlaneseq
      %v990 = vshrl.u32 %v989, 7
      %v991 = vsub.s32 2, %v990
      %v992 = vrot.slane %v979, %v991
      %v993 = vlaneseq
      %v994 = vshrl.u32 %v993, 7
      %v995 = vsub.s32 3, %v994
      %v996 = vrot.slane %v979, %v995
      %v1129 = vunpack.c.l.b16 %v851
      %v1130 = vunpack.c.h.b16 %v851
      %v1131 = vunpack.c.l.b16 %v852
      %v1132 = vunpack.c.h.b16 %v852
      %v1133 = vunpack.c.l.b16 %v853
      %v1134 = vunpack.c.h.b16 %v853
      %v1135 = vunpack.c.l.b16 %v854
      %v1136 = vunpack.c.h.b16 %v854
      %v1137 = vunpack.c.l.b16 %v855
      %v1138 = vunpack.c.h.b16 %v855
      %v1139 = vunpack.c.l.b16 %v856
      %v1140 = vunpack.c.h.b16 %v856
      %v1141 = vunpack.c.l.b16 %v857
      %v1142 = vunpack.c.h.b16 %v857
      %v1143 = vunpack.c.l.b16 %v858
      %v1144 = vunpack.c.h.b16 %v858
      %v1145 = vunpack.c.l.b16 %v859
      %v1146 = vunpack.c.h.b16 %v859
      %v1147 = vunpack.c.l.b16 %v860
      %v1148 = vunpack.c.h.b16 %v860
      %v1149 = vunpack.c.l.b16 %v861
      %v1150 = vunpack.c.h.b16 %v861
      %v1151 = vunpack.c.l.b16 %v862
      %v1152 = vunpack.c.h.b16 %v862
      %v1153 = vunpack.c.l.b16 %v863
      %v1154 = vunpack.c.h.b16 %v863
      %v1155 = vunpack.c.l.b16 %v864
      %v1156 = vunpack.c.h.b16 %v864
      %v1157 = vunpack.c.l.b16 %v865
      %v1158 = vunpack.c.h.b16 %v865
      %v1159 = vunpack.c.l.b16 %v866
      %v1160 = vunpack.c.h.b16 %v866
      %v1161 = vunpack.c.l.b16 %v867
      %v1162 = vunpack.c.h.b16 %v867
      %v1163 = vunpack.c.l.b16 %v868
      %v1164 = vunpack.c.h.b16 %v868
      %v1165 = vunpack.c.l.b16 %v869
      %v1166 = vunpack.c.h.b16 %v869
      %v1167 = vunpack.c.l.b16 %v870
      %v1168 = vunpack.c.h.b16 %v870
      %v1169 = vunpack.c.l.b16 %v871
      %v1170 = vunpack.c.h.b16 %v871
      %v1171 = vunpack.c.l.b16 %v872
      %v1172 = vunpack.c.h.b16 %v872
      %v1173 = vunpack.c.l.b16 %v873
      %v1174 = vunpack.c.h.b16 %v873
      %v1175 = vunpack.c.l.b16 %v874
      %v1176 = vunpack.c.h.b16 %v874
      %v1177 = vunpack.c.l.b16 %v875
      %v1178 = vunpack.c.h.b16 %v875
      %v1179 = vunpack.c.l.b16 %v876
      %v1180 = vunpack.c.h.b16 %v876
      %v1181 = vunpack.c.l.b16 %v877
      %v1182 = vunpack.c.h.b16 %v877
      %v1183 = vunpack.c.l.b16 %v878
      %v1184 = vunpack.c.h.b16 %v878
      %v1185 = vunpack.c.l.b16 %v879
      %v1186 = vunpack.c.h.b16 %v879
      %v1187 = vunpack.c.l.b16 %v880
      %v1188 = vunpack.c.h.b16 %v880
      %v1189 = vunpack.c.l.b16 %v881
      %v1190 = vunpack.c.h.b16 %v881
      %v1191 = vunpack.c.l.b16 %v882
      %v1192 = vunpack.c.h.b16 %v882
      %v1193 = vunpack.c.l.b16 %v883
      %v1194 = vunpack.c.h.b16 %v883
      %v1195 = vunpack.c.l.b16 %v884
      %v1196 = vunpack.c.h.b16 %v884
      %v1197 = vunpack.c.l.b16 %v885
      %v1198 = vunpack.c.h.b16 %v885
      %v1199 = vunpack.c.l.b16 %v886
      %v1200 = vunpack.c.h.b16 %v886
      %v1201 = vunpack.c.l.b16 %v887
      %v1202 = vunpack.c.h.b16 %v887
      %v1203 = vunpack.c.l.b16 %v888
      %v1204 = vunpack.c.h.b16 %v888
      %v1205 = vunpack.c.l.b16 %v889
      %v1206 = vunpack.c.h.b16 %v889
      %v1207 = vunpack.c.l.b16 %v890
      %v1208 = vunpack.c.h.b16 %v890
      %v1209 = vunpack.c.l.b16 %v891
      %v1210 = vunpack.c.h.b16 %v891
      %v1211 = vunpack.c.l.b16 %v892
      %v1212 = vunpack.c.h.b16 %v892
      %v1213 = vunpack.c.l.b16 %v893
      %v1214 = vunpack.c.h.b16 %v893
      %v1215 = vunpack.c.l.b16 %v894
      %v1216 = vunpack.c.h.b16 %v894
      %v1217 = vunpack.c.l.b16 %v895
      %v1218 = vunpack.c.h.b16 %v895
      %v1219 = vunpack.c.l.b16 %v896
      %v1220 = vunpack.c.h.b16 %v896
      %v1221 = vunpack.c.l.b16 %v897
      %v1222 = vunpack.c.h.b16 %v897
      %v1223 = vunpack.c.l.b16 %v898
      %v1224 = vunpack.c.h.b16 %v898
      %v1225 = vunpack.c.l.b16 %v899
      %v1226 = vunpack.c.h.b16 %v899
      %v1227 = vunpack.c.l.b16 %v900
      %v1228 = vunpack.c.h.b16 %v900
      %v1229 = vunpack.c.l.b16 %v901
      %v1230 = vunpack.c.h.b16 %v901
      %v1231 = vunpack.c.l.b16 %v902
      %v1232 = vunpack.c.h.b16 %v902
      %v1233 = vunpack.c.l.b16 %v903
      %v1234 = vunpack.c.h.b16 %v903
      %v1235 = vunpack.c.l.b16 %v904
      %v1236 = vunpack.c.h.b16 %v904
      %v1237 = vunpack.c.l.b16 %v905
      %v1238 = vunpack.c.h.b16 %v905
      %v1239 = vunpack.c.l.b16 %v906
      %v1240 = vunpack.c.h.b16 %v906
      %v1241 = vunpack.c.l.b16 %v907
      %v1242 = vunpack.c.h.b16 %v907
      %v1243 = vunpack.c.l.b16 %v908
      %v1244 = vunpack.c.h.b16 %v908
      %v1245 = vunpack.c.l.b16 %v909
      %v1246 = vunpack.c.h.b16 %v909
      %v1247 = vunpack.c.l.b16 %v910
      %v1248 = vunpack.c.h.b16 %v910
      %v1249 = vunpack.c.l.b16 %v911
      %v1250 = vunpack.c.h.b16 %v911
      %v1251 = vunpack.c.l.b16 %v912
      %v1252 = vunpack.c.h.b16 %v912
      %v1253 = vunpack.c.l.b16 %v913
      %v1254 = vunpack.c.h.b16 %v913
      %v1255 = vunpack.c.l.b16 %v914
      %v1256 = vunpack.c.h.b16 %v914
      %v1257 = vunpack.c.l.b16 %v915
      %v1258 = vunpack.c.h.b16 %v915
      %v1259 = vunpack.c.l.b16 %v916
      %v1260 = vunpack.c.h.b16 %v916
      %v1261 = vunpack.c.l.b16 %v917
      %v1262 = vunpack.c.h.b16 %v917
      %v1263 = vunpack.c.l.b16 %v918
      %v1264 = vunpack.c.h.b16 %v918
      %v1265 = vunpack.c.l.b16 %v919
      %v1266 = vunpack.c.h.b16 %v919
      %v1267 = vunpack.c.l.b16 %v920
      %v1268 = vunpack.c.h.b16 %v920
      %v1269 = vunpack.c.l.b16 %v921
      %v1270 = vunpack.c.h.b16 %v921
      %v1271 = vunpack.c.l.b16 %v922
      %v1272 = vunpack.c.h.b16 %v922
      %v1273 = vunpack.c.l.b16 %v923
      %v1274 = vunpack.c.h.b16 %v923
      %v1275 = vunpack.c.l.b16 %v924
      %v1276 = vunpack.c.h.b16 %v924
      %v1277 = vunpack.c.l.b16 %v925
      %v1278 = vunpack.c.h.b16 %v925
      %v1279 = vunpack.c.l.b16 %v926
      %v1280 = vunpack.c.h.b16 %v926
      %v1281 = vunpack.c.l.b16 %v927
      %v1282 = vunpack.c.h.b16 %v927
      %v1283 = vunpack.c.l.b16 %v928
      %v1284 = vunpack.c.h.b16 %v928
      %v1285 = vunpack.c.l.b16 %v929
      %v1286 = vunpack.c.h.b16 %v929
      %v1287 = vunpack.c.l.b16 %v930
      %v1288 = vunpack.c.h.b16 %v930
      %v1289 = vunpack.c.l.b16 %v931
      %v1290 = vunpack.c.h.b16 %v931
      %v1291 = vunpack.c.l.b16 %v932
      %v1292 = vunpack.c.h.b16 %v932
      %v1293 = vunpack.c.l.b16 %v933
      %v1294 = vunpack.c.h.b16 %v933
      %v1295 = vunpack.c.l.b16 %v934
      %v1296 = vunpack.c.h.b16 %v934
      %v1297 = vunpack.c.l.b16 %v935
      %v1298 = vunpack.c.h.b16 %v935
      %v1299 = vunpack.c.l.b16 %v936
      %v1300 = vunpack.c.h.b16 %v936
      %v1301 = vunpack.c.l.b16 %v937
      %v1302 = vunpack.c.h.b16 %v937
      %v1303 = vunpack.c.l.b16 %v938
      %v1304 = vunpack.c.h.b16 %v938
      %v1305 = vunpack.c.l.b16 %v939
      %v1306 = vunpack.c.h.b16 %v939
      %v1307 = vunpack.c.l.b16 %v940
      %v1308 = vunpack.c.h.b16 %v940
      %v1309 = vunpack.c.l.b16 %v941
      %v1310 = vunpack.c.h.b16 %v941
      %v1311 = vunpack.c.l.b16 %v942
      %v1312 = vunpack.c.h.b16 %v942
      %v1313 = vunpack.c.l.b16 %v943
      %v1314 = vunpack.c.h.b16 %v943
      %v1315 = vunpack.c.l.b16 %v944
      %v1316 = vunpack.c.h.b16 %v944
      %v1317 = vunpack.c.l.b16 %v945
      %v1318 = vunpack.c.h.b16 %v945
      %v1319 = vunpack.c.l.b16 %v946
      %v1320 = vunpack.c.h.b16 %v946
      %v1321 = vunpack.c.l.b16 %v947
      %v1322 = vunpack.c.h.b16 %v947
      %v1323 = vunpack.c.l.b16 %v948
      %v1324 = vunpack.c.h.b16 %v948
      %v1325 = vunpack.c.l.b16 %v949
      %v1326 = vunpack.c.h.b16 %v949
      %v1327 = vunpack.c.l.b16 %v950
      %v1328 = vunpack.c.h.b16 %v950
      %v1329 = vunpack.c.l.b16 %v951
      %v1330 = vunpack.c.h.b16 %v951
      %v1331 = vunpack.c.l.b16 %v952
      %v1332 = vunpack.c.h.b16 %v952
      %v1333 = vunpack.c.l.b16 %v953
      %v1334 = vunpack.c.h.b16 %v953
      %v1335 = vunpack.c.l.b16 %v954
      %v1336 = vunpack.c.h.b16 %v954
      %v1337 = vunpack.c.l.b16 %v955
      %v1338 = vunpack.c.h.b16 %v955
      %v1339 = vunpack.c.l.b16 %v956
      %v1340 = vunpack.c.h.b16 %v956
      %v1341 = vunpack.c.l.b16 %v957
      %v1342 = vunpack.c.h.b16 %v957
      %v1343 = vunpack.c.l.b16 %v958
      %v1344 = vunpack.c.h.b16 %v958
      %v1345 = vunpack.c.l.b16 %v959
      %v1346 = vunpack.c.h.b16 %v959
      %v1347 = vunpack.c.l.b16 %v960
      %v1348 = vunpack.c.h.b16 %v960
      %v1349 = vunpack.c.l.b16 %v961
      %v1350 = vunpack.c.h.b16 %v961
      %v1351 = vunpack.c.l.b16 %v962
      %v1352 = vunpack.c.h.b16 %v962
      %v1353 = vunpack.c.l.b16 %v963
      %v1354 = vunpack.c.h.b16 %v963
      %v1355 = vunpack.c.l.b16 %v964
      %v1356 = vunpack.c.h.b16 %v964
      %v1357 = vunpack.c.l.b16 %v965
      %v1358 = vunpack.c.h.b16 %v965
      %v1359 = vunpack.c.l.b16 %v966
      %v1360 = vunpack.c.h.b16 %v966
      %v1361 = vunpack.c.l.b16 %v967
      %v1362 = vunpack.c.h.b16 %v967
      %v1363 = vunpack.c.l.b16 %v968
      %v1364 = vunpack.c.h.b16 %v968
      %v1365 = vunpack.c.l.b16 %v969
      %v1366 = vunpack.c.h.b16 %v969
      %v1367 = vunpack.c.l.b16 %v970
      %v1368 = vunpack.c.h.b16 %v970
      %v1369 = vunpack.c.l.b16 %v971
      %v1370 = vunpack.c.h.b16 %v971
      %v1371 = vunpack.c.l.b16 %v972
      %v1372 = vunpack.c.h.b16 %v972
      %v1373 = vunpack.c.l.b16 %v973
      %v1374 = vunpack.c.h.b16 %v973
      %v1375 = vunpack.c.l.b16 %v974
      %v1376 = vunpack.c.h.b16 %v974
      %v1377 = vunpack.c.l.b16 %v975
      %v1378 = vunpack.c.h.b16 %v975
      %v1379 = vunpack.c.l.b16 %v976
      %v1380 = vunpack.c.h.b16 %v976
      %v1381 = vunpack.c.l.b16 %v977
      %v1382 = vunpack.c.h.b16 %v977
      %v1383 = vunpack.c.l.b16 %v978
      %v1384 = vunpack.c.h.b16 %v978
      %v1385 = vpack.c.b16 %v1133, %v1129
      %v1386 = vpack.c.b16 %v1134, %v1130
      %v1387 = vpack.c.b16 %v1135, %v1131
      %v1388 = vpack.c.b16 %v1136, %v1132
      %v1389 = vpack.c.b16 %v1141, %v1137
      %v1390 = vpack.c.b16 %v1142, %v1138
      %v1391 = vpack.c.b16 %v1143, %v1139
      %v1392 = vpack.c.b16 %v1144, %v1140
      %v1393 = vpack.c.b16 %v1149, %v1145
      %v1394 = vpack.c.b16 %v1150, %v1146
      %v1395 = vpack.c.b16 %v1151, %v1147
      %v1396 = vpack.c.b16 %v1152, %v1148
      %v1397 = vpack.c.b16 %v1157, %v1153
      %v1398 = vpack.c.b16 %v1158, %v1154
      %v1399 = vpack.c.b16 %v1159, %v1155
      %v1400 = vpack.c.b16 %v1160, %v1156
      %v1401 = vpack.c.b16 %v1165, %v1161
      %v1402 = vpack.c.b16 %v1166, %v1162
      %v1403 = vpack.c.b16 %v1167, %v1163
      %v1404 = vpack.c.b16 %v1168, %v1164
      %v1405 = vpack.c.b16 %v1173, %v1169
      %v1406 = vpack.c.b16 %v1174, %v1170
      %v1407 = vpack.c.b16 %v1175, %v1171
      %v1408 = vpack.c.b16 %v1176, %v1172
      %v1409 = vpack.c.b16 %v1181, %v1177
      %v1410 = vpack.c.b16 %v1182, %v1178
      %v1411 = vpack.c.b16 %v1183, %v1179
      %v1412 = vpack.c.b16 %v1184, %v1180
      %v1413 = vpack.c.b16 %v1189, %v1185
      %v1414 = vpack.c.b16 %v1190, %v1186
      %v1415 = vpack.c.b16 %v1191, %v1187
      %v1416 = vpack.c.b16 %v1192, %v1188
      %v1417 = vpack.c.b16 %v1197, %v1193
      %v1418 = vpack.c.b16 %v1198, %v1194
      %v1419 = vpack.c.b16 %v1199, %v1195
      %v1420 = vpack.c.b16 %v1200, %v1196
      %v1421 = vpack.c.b16 %v1205, %v1201
      %v1422 = vpack.c.b16 %v1206, %v1202
      %v1423 = vpack.c.b16 %v1207, %v1203
      %v1424 = vpack.c.b16 %v1208, %v1204
      %v1425 = vpack.c.b16 %v1213, %v1209
      %v1426 = vpack.c.b16 %v1214, %v1210
      %v1427 = vpack.c.b16 %v1215, %v1211
      %v1428 = vpack.c.b16 %v1216, %v1212
      %v1429 = vpack.c.b16 %v1221, %v1217
      %v1430 = vpack.c.b16 %v1222, %v1218
      %v1431 = vpack.c.b16 %v1223, %v1219
      %v1432 = vpack.c.b16 %v1224, %v1220
      %v1433 = vpack.c.b16 %v1229, %v1225
      %v1434 = vpack.c.b16 %v1230, %v1226
      %v1435 = vpack.c.b16 %v1231, %v1227
      %v1436 = vpack.c.b16 %v1232, %v1228
      %v1437 = vpack.c.b16 %v1237, %v1233
      %v1438 = vpack.c.b16 %v1238, %v1234
      %v1439 = vpack.c.b16 %v1239, %v1235
      %v1440 = vpack.c.b16 %v1240, %v1236
      %v1441 = vpack.c.b16 %v1245, %v1241
      %v1442 = vpack.c.b16 %v1246, %v1242
      %v1443 = vpack.c.b16 %v1247, %v1243
      %v1444 = vpack.c.b16 %v1248, %v1244
      %v1445 = vpack.c.b16 %v1253, %v1249
      %v1446 = vpack.c.b16 %v1254, %v1250
      %v1447 = vpack.c.b16 %v1255, %v1251
      %v1448 = vpack.c.b16 %v1256, %v1252
      %v1449 = vpack.c.b16 %v1261, %v1257
      %v1450 = vpack.c.b16 %v1262, %v1258
      %v1451 = vpack.c.b16 %v1263, %v1259
      %v1452 = vpack.c.b16 %v1264, %v1260
      %v1453 = vpack.c.b16 %v1269, %v1265
      %v1454 = vpack.c.b16 %v1270, %v1266
      %v1455 = vpack.c.b16 %v1271, %v1267
      %v1456 = vpack.c.b16 %v1272, %v1268
      %v1457 = vpack.c.b16 %v1277, %v1273
      %v1458 = vpack.c.b16 %v1278, %v1274
      %v1459 = vpack.c.b16 %v1279, %v1275
      %v1460 = vpack.c.b16 %v1280, %v1276
      %v1461 = vpack.c.b16 %v1285, %v1281
      %v1462 = vpack.c.b16 %v1286, %v1282
      %v1463 = vpack.c.b16 %v1287, %v1283
      %v1464 = vpack.c.b16 %v1288, %v1284
      %v1465 = vpack.c.b16 %v1293, %v1289
      %v1466 = vpack.c.b16 %v1294, %v1290
      %v1467 = vpack.c.b16 %v1295, %v1291
      %v1468 = vpack.c.b16 %v1296, %v1292
      %v1469 = vpack.c.b16 %v1301, %v1297
      %v1470 = vpack.c.b16 %v1302, %v1298
      %v1471 = vpack.c.b16 %v1303, %v1299
      %v1472 = vpack.c.b16 %v1304, %v1300
      %v1473 = vpack.c.b16 %v1309, %v1305
      %v1474 = vpack.c.b16 %v1310, %v1306
      %v1475 = vpack.c.b16 %v1311, %v1307
      %v1476 = vpack.c.b16 %v1312, %v1308
      %v1477 = vpack.c.b16 %v1317, %v1313
      %v1478 = vpack.c.b16 %v1318, %v1314
      %v1479 = vpack.c.b16 %v1319, %v1315
      %v1480 = vpack.c.b16 %v1320, %v1316
      %v1481 = vpack.c.b16 %v1325, %v1321
      %v1482 = vpack.c.b16 %v1326, %v1322
      %v1483 = vpack.c.b16 %v1327, %v1323
      %v1484 = vpack.c.b16 %v1328, %v1324
      %v1485 = vpack.c.b16 %v1333, %v1329
      %v1486 = vpack.c.b16 %v1334, %v1330
      %v1487 = vpack.c.b16 %v1335, %v1331
      %v1488 = vpack.c.b16 %v1336, %v1332
      %v1489 = vpack.c.b16 %v1341, %v1337
      %v1490 = vpack.c.b16 %v1342, %v1338
      %v1491 = vpack.c.b16 %v1343, %v1339
      %v1492 = vpack.c.b16 %v1344, %v1340
      %v1493 = vpack.c.b16 %v1349, %v1345
      %v1494 = vpack.c.b16 %v1350, %v1346
      %v1495 = vpack.c.b16 %v1351, %v1347
      %v1496 = vpack.c.b16 %v1352, %v1348
      %v1497 = vpack.c.b16 %v1357, %v1353
      %v1498 = vpack.c.b16 %v1358, %v1354
      %v1499 = vpack.c.b16 %v1359, %v1355
      %v1500 = vpack.c.b16 %v1360, %v1356
      %v1501 = vpack.c.b16 %v1365, %v1361
      %v1502 = vpack.c.b16 %v1366, %v1362
      %v1503 = vpack.c.b16 %v1367, %v1363
      %v1504 = vpack.c.b16 %v1368, %v1364
      %v1505 = vpack.c.b16 %v1373, %v1369
      %v1506 = vpack.c.b16 %v1374, %v1370
      %v1507 = vpack.c.b16 %v1375, %v1371
      %v1508 = vpack.c.b16 %v1376, %v1372
      %v1509 = vpack.c.b16 %v1381, %v1377
      %v1510 = vpack.c.b16 %v1382, %v1378
      %v1511 = vpack.c.b16 %v1383, %v1379
      %v1512 = vpack.c.b16 %v1384, %v1380
      %1641 = vmatprep.subr.bf16.mxu0 %v1386
      %1642 = vmatpush1.bf16.msra.mxu0 %v1385
      %1643 = vmatprep.subr.bf16.mxu0 %v1390
      %1644 = vmatpush1.bf16.msra.mxu0 %v1389
      %1645 = vmatprep.subr.bf16.mxu0 %v1394
      %1646 = vmatpush1.bf16.msra.mxu0 %v1393
      %1647 = vmatprep.subr.bf16.mxu0 %v1398
      %1648 = vmatpush1.bf16.msra.mxu0 %v1397
      %1649 = vmatprep.subr.bf16.mxu0 %v1402
      %1650 = vmatpush1.bf16.msra.mxu0 %v1401
      %1651 = vmatprep.subr.bf16.mxu0 %v1406
      %1652 = vmatpush1.bf16.msra.mxu0 %v1405
      %1653 = vmatprep.subr.bf16.mxu0 %v1410
      %1654 = vmatpush1.bf16.msra.mxu0 %v1409
      %1655 = vmatprep.subr.bf16.mxu0 %v1414
      %1656 = vmatpush1.bf16.msra.mxu0 %v1413
      %1657 = vmatprep.subr.bf16.mxu0 %v1418
      %1658 = vmatpush1.bf16.msra.mxu0 %v1417
      %1659 = vmatprep.subr.bf16.mxu0 %v1422
      %1660 = vmatpush1.bf16.msra.mxu0 %v1421
      %1661 = vmatprep.subr.bf16.mxu0 %v1426
      %1662 = vmatpush1.bf16.msra.mxu0 %v1425
      %1663 = vmatprep.subr.bf16.mxu0 %v1430
      %1664 = vmatpush1.bf16.msra.mxu0 %v1429
      %1665 = vmatprep.subr.bf16.mxu0 %v1434
      %1666 = vmatpush1.bf16.msra.mxu0 %v1433
      %1667 = vmatprep.subr.bf16.mxu0 %v1438
      %1668 = vmatpush1.bf16.msra.mxu0 %v1437
      %1669 = vmatprep.subr.bf16.mxu0 %v1442
      %1670 = vmatpush1.bf16.msra.mxu0 %v1441
      %1671 = vmatprep.subr.bf16.mxu0 %v1446
      %1672 = vmatpush1.bf16.msra.mxu0 %v1445
      %1673 = vmatprep.mubr.bf16.mxu0 %v820
      %1674 = vmatmul.mubr.bf16.gmra.mrb[0].mxu0 %v819
      %v1675 = vpop.f32.mrb[0].mxu0
      %v1676 = vadd.f32 %v984, %v1675
      %v1677 = vpop.f32.mrb[0].mxu0
      %v1678 = vadd.f32 %v988, %v1677
      %v1679 = vpop.f32.mrb[0].mxu0
      %v1680 = vadd.f32 %v984, %v1679
      %v1681 = vpop.f32.mrb[0].mxu0
      %v1682 = vadd.f32 %v988, %v1681
      %1683 = vmatprep.mubr.bf16.mxu0 %v824
      %1684 = vmatmul.mubr.bf16.gmra.mrb[0].mxu0 %v823
      %v1685 = vpop.f32.mrb[0].mxu0
      %v1686 = vadd.f32 %v984, %v1685
      %v1687 = vpop.f32.mrb[0].mxu0
      %v1688 = vadd.f32 %v988, %v1687
      %v1689 = vpop.f32.mrb[0].mxu0
      %v1690 = vadd.f32 %v984, %v1689
      %v1691 = vpop.f32.mrb[0].mxu0
      %v1692 = vadd.f32 %v988, %v1691
      %1693 = vmatprep.mubr.bf16.mxu0 %v828
      %1694 = vmatmul.mubr.bf16.gmra.mrb[0].mxu0 %v827
      %v1695 = vpop.f32.mrb[0].mxu0
      %v1696 = vadd.f32 %v984, %v1695
      %v1697 = vpop.f32.mrb[0].mxu0
      %v1698 = vadd.f32 %v988, %v1697
      %v1699 = vpop.f32.mrb[0].mxu0
      %v1700 = vadd.f32 %v984, %v1699
      %v1701 = vpop.f32.mrb[0].mxu0
      %v1702 = vadd.f32 %v988, %v1701
      %1703 = vmatprep.mubr.bf16.mxu0 %v832
      %1704 = vmatmul.mubr.bf16.gmra.mrb[0].mxu0 %v831
      %v1705 = vpop.f32.mrb[0].mxu0
      %v1706 = vadd.f32 %v984, %v1705
      %v1707 = vpop.f32.mrb[0].mxu0
      %v1708 = vadd.f32 %v988, %v1707
      %v1709 = vpop.f32.mrb[0].mxu0
      %v1710 = vadd.f32 %v984, %v1709
      %v1711 = vpop.f32.mrb[0].mxu0
      %v1712 = vadd.f32 %v988, %v1711
      %1713 = vmatprep.mubr.bf16.mxu0 %v836
      %1714 = vmatmul.mubr.bf16.gmra.mrb[0].mxu0 %v835
      %v1715 = vpop.f32.mrb[0].mxu0
      %v1716 = vadd.f32 %v984, %v1715
      %v1717 = vpop.f32.mrb[0].mxu0
      %v1718 = vadd.f32 %v988, %v1717
      %v1719 = vpop.f32.mrb[0].mxu0
      %v1720 = vadd.f32 %v984, %v1719
      %v1721 = vpop.f32.mrb[0].mxu0
      %v1722 = vadd.f32 %v988, %v1721
      %1723 = vmatprep.mubr.bf16.mxu0 %v840
      %1724 = vmatmul.mubr.bf16.gmra.mrb[0].mxu0 %v839
      %v1725 = vpop.f32.mrb[0].mxu0
      %v1726 = vadd.f32 %v984, %v1725
      %v1727 = vpop.f32.mrb[0].mxu0
      %v1728 = vadd.f32 %v988, %v1727
      %v1729 = vpop.f32.mrb[0].mxu0
      %v1730 = vadd.f32 %v984, %v1729
      %v1731 = vpop.f32.mrb[0].mxu0
      %v1732 = vadd.f32 %v988, %v1731
      %1733 = vmatprep.mubr.bf16.mxu0 %v844
      %1734 = vmatmul.mubr.bf16.gmra.mrb[0].mxu0 %v843
      %v1735 = vpop.f32.mrb[0].mxu0
      %v1736 = vadd.f32 %v984, %v1735
      %v1737 = vpop.f32.mrb[0].mxu0
      %v1738 = vadd.f32 %v988, %v1737
      %v1739 = vpop.f32.mrb[0].mxu0
      %v1740 = vadd.f32 %v984, %v1739
      %v1741 = vpop.f32.mrb[0].mxu0
      %v1742 = vadd.f32 %v988, %v1741
      %1743 = vmatprep.mubr.bf16.mxu0 %v848
      %1744 = vmatmul.mubr.bf16.gmra.mrb[0].mxu0 %v847
      %v1745 = vpop.f32.mrb[0].mxu0
      %v1746 = vadd.f32 %v984, %v1745
      %v1747 = vpop.f32.mrb[0].mxu0
      %v1748 = vadd.f32 %v988, %v1747
      %v1749 = vpop.f32.mrb[0].mxu0
      %v1750 = vadd.f32 %v984, %v1749
      %v1751 = vpop.f32.mrb[0].mxu0
      %v1752 = vadd.f32 %v988, %v1751
      %1753 = vdwg.mxu0
      %1754 = vmatprep.subr.bf16.mxu0 %v1450
      %1755 = vmatpush1.bf16.msra.mxu0 %v1449
      %1756 = vmatprep.subr.bf16.mxu0 %v1454
      %1757 = vmatpush1.bf16.msra.mxu0 %v1453
      %1758 = vmatprep.subr.bf16.mxu0 %v1458
      %1759 = vmatpush1.bf16.msra.mxu0 %v1457
      %1760 = vmatprep.subr.bf16.mxu0 %v1462
      %1761 = vmatpush1.bf16.msra.mxu0 %v1461
      %1762 = vmatprep.subr.bf16.mxu0 %v1466
      %1763 = vmatpush1.bf16.msra.mxu0 %v1465
      %1764 = vmatprep.subr.bf16.mxu0 %v1470
      %1765 = vmatpush1.bf16.msra.mxu0 %v1469
      %1766 = vmatprep.subr.bf16.mxu0 %v1474
      %1767 = vmatpush1.bf16.msra.mxu0 %v1473
      %1768 = vmatprep.subr.bf16.mxu0 %v1478
      %1769 = vmatpush1.bf16.msra.mxu0 %v1477
      %1770 = vmatprep.subr.bf16.mxu0 %v1482
      %1771 = vmatpush1.bf16.msra.mxu0 %v1481
      %1772 = vmatprep.subr.bf16.mxu0 %v1486
      %1773 = vmatpush1.bf16.msra.mxu0 %v1485
      %1774 = vmatprep.subr.bf16.mxu0 %v1490
      %1775 = vmatpush1.bf16.msra.mxu0 %v1489
      %1776 = vmatprep.subr.bf16.mxu0 %v1494
      %1777 = vmatpush1.bf16.msra.mxu0 %v1493
      %1778 = vmatprep.subr.bf16.mxu0 %v1498
      %1779 = vmatpush1.bf16.msra.mxu0 %v1497
      %1780 = vmatprep.subr.bf16.mxu0 %v1502
      %1781 = vmatpush1.bf16.msra.mxu0 %v1501
      %1782 = vmatprep.subr.bf16.mxu0 %v1506
      %1783 = vmatpush1.bf16.msra.mxu0 %v1505
      %1784 = vmatprep.subr.bf16.mxu0 %v1510
      %1785 = vmatpush1.bf16.msra.mxu0 %v1509
      %1786 = vmatprep.mubr.bf16.mxu0 %v822
      %1787 = vmatmul.mubr.bf16.gmra.mrb[0].mxu0 %v821
      %v1788 = vpop.f32.mrb[0].mxu0
      %v1789 = vadd.f32 %v1676, %v1788
      %v1790 = vpop.f32.mrb[0].mxu0
      %v1791 = vadd.f32 %v1678, %v1790
      %v1792 = vpop.f32.mrb[0].mxu0
      %v1793 = vadd.f32 %v1680, %v1792
      %v1794 = vpop.f32.mrb[0].mxu0
      %v1795 = vadd.f32 %v1682, %v1794
      %1796 = vmatprep.mubr.bf16.mxu0 %v826
      %1797 = vmatmul.mubr.bf16.gmra.mrb[0].mxu0 %v825
      %v1798 = vpop.f32.mrb[0].mxu0
      %v1799 = vadd.f32 %v1686, %v1798
      %v1800 = vpop.f32.mrb[0].mxu0
      %v1801 = vadd.f32 %v1688, %v1800
      %v1802 = vpop.f32.mrb[0].mxu0
      %v1803 = vadd.f32 %v1690, %v1802
      %v1804 = vpop.f32.mrb[0].mxu0
      %v1805 = vadd.f32 %v1692, %v1804
      %1806 = vmatprep.mubr.bf16.mxu0 %v830
      %1807 = vmatmul.mubr.bf16.gmra.mrb[0].mxu0 %v829
      %v1808 = vpop.f32.mrb[0].mxu0
      %v1809 = vadd.f32 %v1696, %v1808
      %v1810 = vpop.f32.mrb[0].mxu0
      %v1811 = vadd.f32 %v1698, %v1810
      %v1812 = vpop.f32.mrb[0].mxu0
      %v1813 = vadd.f32 %v1700, %v1812
      %v1814 = vpop.f32.mrb[0].mxu0
      %v1815 = vadd.f32 %v1702, %v1814
      %1816 = vmatprep.mubr.bf16.mxu0 %v834
      %1817 = vmatmul.mubr.bf16.gmra.mrb[0].mxu0 %v833
      %v1818 = vpop.f32.mrb[0].mxu0
      %v1819 = vadd.f32 %v1706, %v1818
      %v1820 = vpop.f32.mrb[0].mxu0
      %v1821 = vadd.f32 %v1708, %v1820
      %v1822 = vpop.f32.mrb[0].mxu0
      %v1823 = vadd.f32 %v1710, %v1822
      %v1824 = vpop.f32.mrb[0].mxu0
      %v1825 = vadd.f32 %v1712, %v1824
      %1826 = vmatprep.mubr.bf16.mxu0 %v838
      %1827 = vmatmul.mubr.bf16.gmra.mrb[0].mxu0 %v837
      %v1828 = vpop.f32.mrb[0].mxu0
      %v1829 = vadd.f32 %v1716, %v1828
      %v1830 = vpop.f32.mrb[0].mxu0
      %v1831 = vadd.f32 %v1718, %v1830
      %v1832 = vpop.f32.mrb[0].mxu0
      %v1833 = vadd.f32 %v1720, %v1832
      %v1834 = vpop.f32.mrb[0].mxu0
      %v1835 = vadd.f32 %v1722, %v1834
      %1836 = vmatprep.mubr.bf16.mxu0 %v842
      %1837 = vmatmul.mubr.bf16.gmra.mrb[0].mxu0 %v841
      %v1838 = vpop.f32.mrb[0].mxu0
      %v1839 = vadd.f32 %v1726, %v1838
      %v1840 = vpop.f32.mrb[0].mxu0
      %v1841 = vadd.f32 %v1728, %v1840
      %v1842 = vpop.f32.mrb[0].mxu0
      %v1843 = vadd.f32 %v1730, %v1842
      %v1844 = vpop.f32.mrb[0].mxu0
      %v1845 = vadd.f32 %v1732, %v1844
      %1846 = vmatprep.mubr.bf16.mxu0 %v846
      %1847 = vmatmul.mubr.bf16.gmra.mrb[0].mxu0 %v845
      %v1848 = vpop.f32.mrb[0].mxu0
      %v1849 = vadd.f32 %v1736, %v1848
      %v1850 = vpop.f32.mrb[0].mxu0
      %v1851 = vadd.f32 %v1738, %v1850
      %v1852 = vpop.f32.mrb[0].mxu0
      %v1853 = vadd.f32 %v1740, %v1852
      %v1854 = vpop.f32.mrb[0].mxu0
      %v1855 = vadd.f32 %v1742, %v1854
      %1856 = vmatprep.mubr.bf16.mxu0 %v850
      %1857 = vmatmul.mubr.bf16.gmra.mrb[0].mxu0 %v849
      %v1858 = vpop.f32.mrb[0].mxu0
      %v1859 = vadd.f32 %v1746, %v1858
      %v1860 = vpop.f32.mrb[0].mxu0
      %v1861 = vadd.f32 %v1748, %v1860
      %v1862 = vpop.f32.mrb[0].mxu0
      %v1863 = vadd.f32 %v1750, %v1862
      %v1864 = vpop.f32.mrb[0].mxu0
      %v1865 = vadd.f32 %v1752, %v1864
      %1866 = vdwg.mxu0
      %1867 = vmatprep.subr.bf16.mxu0 %v1388
      %1868 = vmatpush1.bf16.msra.mxu0 %v1387
      %1869 = vmatprep.subr.bf16.mxu0 %v1392
      %1870 = vmatpush1.bf16.msra.mxu0 %v1391
      %1871 = vmatprep.subr.bf16.mxu0 %v1396
      %1872 = vmatpush1.bf16.msra.mxu0 %v1395
      %1873 = vmatprep.subr.bf16.mxu0 %v1400
      %1874 = vmatpush1.bf16.msra.mxu0 %v1399
      %1875 = vmatprep.subr.bf16.mxu0 %v1404
      %1876 = vmatpush1.bf16.msra.mxu0 %v1403
      %1877 = vmatprep.subr.bf16.mxu0 %v1408
      %1878 = vmatpush1.bf16.msra.mxu0 %v1407
      %1879 = vmatprep.subr.bf16.mxu0 %v1412
      %1880 = vmatpush1.bf16.msra.mxu0 %v1411
      %1881 = vmatprep.subr.bf16.mxu0 %v1416
      %1882 = vmatpush1.bf16.msra.mxu0 %v1415
      %1883 = vmatprep.subr.bf16.mxu0 %v1420
      %1884 = vmatpush1.bf16.msra.mxu0 %v1419
      %1885 = vmatprep.subr.bf16.mxu0 %v1424
      %1886 = vmatpush1.bf16.msra.mxu0 %v1423
      %1887 = vmatprep.subr.bf16.mxu0 %v1428
      %1888 = vmatpush1.bf16.msra.mxu0 %v1427
      %1889 = vmatprep.subr.bf16.mxu0 %v1432
      %1890 = vmatpush1.bf16.msra.mxu0 %v1431
      %1891 = vmatprep.subr.bf16.mxu0 %v1436
      %1892 = vmatpush1.bf16.msra.mxu0 %v1435
      %1893 = vmatprep.subr.bf16.mxu0 %v1440
      %1894 = vmatpush1.bf16.msra.mxu0 %v1439
      %1895 = vmatprep.subr.bf16.mxu0 %v1444
      %1896 = vmatpush1.bf16.msra.mxu0 %v1443
      %1897 = vmatprep.subr.bf16.mxu0 %v1448
      %1898 = vmatpush1.bf16.msra.mxu0 %v1447
      %1899 = vmatprep.mubr.bf16.mxu0 %v820
      %1900 = vmatmul.mubr.bf16.gmra.mrb[0].mxu0 %v819
      %v1901 = vpop.f32.mrb[0].mxu0
      %v1902 = vadd.f32 %v992, %v1901
      %v1903 = vpop.f32.mrb[0].mxu0
      %v1904 = vadd.f32 %v996, %v1903
      %v1905 = vpop.f32.mrb[0].mxu0
      %v1906 = vadd.f32 %v992, %v1905
      %v1907 = vpop.f32.mrb[0].mxu0
      %v1908 = vadd.f32 %v996, %v1907
      %1909 = vmatprep.mubr.bf16.mxu0 %v824
      %1910 = vmatmul.mubr.bf16.gmra.mrb[0].mxu0 %v823
      %v1911 = vpop.f32.mrb[0].mxu0
      %v1912 = vadd.f32 %v992, %v1911
      %v1913 = vpop.f32.mrb[0].mxu0
      %v1914 = vadd.f32 %v996, %v1913
      %v1915 = vpop.f32.mrb[0].mxu0
      %v1916 = vadd.f32 %v992, %v1915
      %v1917 = vpop.f32.mrb[0].mxu0
      %v1918 = vadd.f32 %v996, %v1917
      %1919 = vmatprep.mubr.bf16.mxu0 %v828
      %1920 = vmatmul.mubr.bf16.gmra.mrb[0].mxu0 %v827
      %v1921 = vpop.f32.mrb[0].mxu0
      %v1922 = vadd.f32 %v992, %v1921
      %v1923 = vpop.f32.mrb[0].mxu0
      %v1924 = vadd.f32 %v996, %v1923
      %v1925 = vpop.f32.mrb[0].mxu0
      %v1926 = vadd.f32 %v992, %v1925
      %v1927 = vpop.f32.mrb[0].mxu0
      %v1928 = vadd.f32 %v996, %v1927
      %1929 = vmatprep.mubr.bf16.mxu0 %v832
      %1930 = vmatmul.mubr.bf16.gmra.mrb[0].mxu0 %v831
      %v1931 = vpop.f32.mrb[0].mxu0
      %v1932 = vadd.f32 %v992, %v1931
      %v1933 = vpop.f32.mrb[0].mxu0
      %v1934 = vadd.f32 %v996, %v1933
      %v1935 = vpop.f32.mrb[0].mxu0
      %v1936 = vadd.f32 %v992, %v1935
      %v1937 = vpop.f32.mrb[0].mxu0
      %v1938 = vadd.f32 %v996, %v1937
      %1939 = vmatprep.mubr.bf16.mxu0 %v836
      %1940 = vmatmul.mubr.bf16.gmra.mrb[0].mxu0 %v835
      %v1941 = vpop.f32.mrb[0].mxu0
      %v1942 = vadd.f32 %v992, %v1941
      %v1943 = vpop.f32.mrb[0].mxu0
      %v1944 = vadd.f32 %v996, %v1943
      %v1945 = vpop.f32.mrb[0].mxu0
      %v1946 = vadd.f32 %v992, %v1945
      %v1947 = vpop.f32.mrb[0].mxu0
      %v1948 = vadd.f32 %v996, %v1947
      %1949 = vmatprep.mubr.bf16.mxu0 %v840
      %1950 = vmatmul.mubr.bf16.gmra.mrb[0].mxu0 %v839
      %v1951 = vpop.f32.mrb[0].mxu0
      %v1952 = vadd.f32 %v992, %v1951
      %v1953 = vpop.f32.mrb[0].mxu0
      %v1954 = vadd.f32 %v996, %v1953
      %v1955 = vpop.f32.mrb[0].mxu0
      %v1956 = vadd.f32 %v992, %v1955
      %v1957 = vpop.f32.mrb[0].mxu0
      %v1958 = vadd.f32 %v996, %v1957
      %1959 = vmatprep.mubr.bf16.mxu0 %v844
      %1960 = vmatmul.mubr.bf16.gmra.mrb[0].mxu0 %v843
      %v1961 = vpop.f32.mrb[0].mxu0
      %v1962 = vadd.f32 %v992, %v1961
      %v1963 = vpop.f32.mrb[0].mxu0
      %v1964 = vadd.f32 %v996, %v1963
      %v1965 = vpop.f32.mrb[0].mxu0
      %v1966 = vadd.f32 %v992, %v1965
      %v1967 = vpop.f32.mrb[0].mxu0
      %v1968 = vadd.f32 %v996, %v1967
      %1969 = vmatprep.mubr.bf16.mxu0 %v848
      %1970 = vmatmul.mubr.bf16.gmra.mrb[0].mxu0 %v847
      %v1971 = vpop.f32.mrb[0].mxu0
      %v1972 = vadd.f32 %v992, %v1971
      %v1973 = vpop.f32.mrb[0].mxu0
      %v1974 = vadd.f32 %v996, %v1973
      %v1975 = vpop.f32.mrb[0].mxu0
      %v1976 = vadd.f32 %v992, %v1975
      %v1977 = vpop.f32.mrb[0].mxu0
      %v1978 = vadd.f32 %v996, %v1977
      %1979 = vdwg.mxu0
      %1980 = vmatprep.subr.bf16.mxu0 %v1452
      %1981 = vmatpush1.bf16.msra.mxu0 %v1451
      %1982 = vmatprep.subr.bf16.mxu0 %v1456
      %1983 = vmatpush1.bf16.msra.mxu0 %v1455
      %1984 = vmatprep.subr.bf16.mxu0 %v1460
      %1985 = vmatpush1.bf16.msra.mxu0 %v1459
      %1986 = vmatprep.subr.bf16.mxu0 %v1464
      %1987 = vmatpush1.bf16.msra.mxu0 %v1463
      %1988 = vmatprep.subr.bf16.mxu0 %v1468
      %1989 = vmatpush1.bf16.msra.mxu0 %v1467
      %1990 = vmatprep.subr.bf16.mxu0 %v1472
      %1991 = vmatpush1.bf16.msra.mxu0 %v1471
      %1992 = vmatprep.subr.bf16.mxu0 %v1476
      %1993 = vmatpush1.bf16.msra.mxu0 %v1475
      %1994 = vmatprep.subr.bf16.mxu0 %v1480
      %1995 = vmatpush1.bf16.msra.mxu0 %v1479
      %1996 = vmatprep.subr.bf16.mxu0 %v1484
      %1997 = vmatpush1.bf16.msra.mxu0 %v1483
      %1998 = vmatprep.subr.bf16.mxu0 %v1488
      %1999 = vmatpush1.bf16.msra.mxu0 %v1487
      %2000 = vmatprep.subr.bf16.mxu0 %v1492
      %2001 = vmatpush1.bf16.msra.mxu0 %v1491
      %2002 = vmatprep.subr.bf16.mxu0 %v1496
      %2003 = vmatpush1.bf16.msra.mxu0 %v1495
      %2004 = vmatprep.subr.bf16.mxu0 %v1500
      %2005 = vmatpush1.bf16.msra.mxu0 %v1499
      %2006 = vmatprep.subr.bf16.mxu0 %v1504
      %2007 = vmatpush1.bf16.msra.mxu0 %v1503
      %2008 = vmatprep.subr.bf16.mxu0 %v1508
      %2009 = vmatpush1.bf16.msra.mxu0 %v1507
      %2010 = vmatprep.subr.bf16.mxu0 %v1512
      %2011 = vmatpush1.bf16.msra.mxu0 %v1511
      %2012 = vmatprep.mubr.bf16.mxu0 %v822
      %2013 = vmatmul.mubr.bf16.gmra.mrb[0].mxu0 %v821
      %v2014 = vpop.f32.mrb[0].mxu0
      %v2015 = vadd.f32 %v1902, %v2014
      %v2016 = vpop.f32.mrb[0].mxu0
      %v2017 = vadd.f32 %v1904, %v2016
      %v2018 = vpop.f32.mrb[0].mxu0
      %v2019 = vadd.f32 %v1906, %v2018
      %v2020 = vpop.f32.mrb[0].mxu0
      %v2021 = vadd.f32 %v1908, %v2020
      %2022 = vmatprep.mubr.bf16.mxu0 %v826
      %2023 = vmatmul.mubr.bf16.gmra.mrb[0].mxu0 %v825
      %v2024 = vpop.f32.mrb[0].mxu0
      %v2025 = vadd.f32 %v1912, %v2024
      %v2026 = vpop.f32.mrb[0].mxu0
      %v2027 = vadd.f32 %v1914, %v2026
      %v2028 = vpop.f32.mrb[0].mxu0
      %v2029 = vadd.f32 %v1916, %v2028
      %v2030 = vpop.f32.mrb[0].mxu0
      %v2031 = vadd.f32 %v1918, %v2030
      %2032 = vmatprep.mubr.bf16.mxu0 %v830
      %2033 = vmatmul.mubr.bf16.gmra.mrb[0].mxu0 %v829
      %v2034 = vpop.f32.mrb[0].mxu0
      %v2035 = vadd.f32 %v1922, %v2034
      %v2036 = vpop.f32.mrb[0].mxu0
      %v2037 = vadd.f32 %v1924, %v2036
      %v2038 = vpop.f32.mrb[0].mxu0
      %v2039 = vadd.f32 %v1926, %v2038
      %v2040 = vpop.f32.mrb[0].mxu0
      %v2041 = vadd.f32 %v1928, %v2040
      %2042 = vmatprep.mubr.bf16.mxu0 %v834
      %2043 = vmatmul.mubr.bf16.gmra.mrb[0].mxu0 %v833
      %v2044 = vpop.f32.mrb[0].mxu0
      %v2045 = vadd.f32 %v1932, %v2044
      %v2046 = vpop.f32.mrb[0].mxu0
      %v2047 = vadd.f32 %v1934, %v2046
      %v2048 = vpop.f32.mrb[0].mxu0
      %v2049 = vadd.f32 %v1936, %v2048
      %v2050 = vpop.f32.mrb[0].mxu0
      %v2051 = vadd.f32 %v1938, %v2050
      %2052 = vmatprep.mubr.bf16.mxu0 %v838
      %2053 = vmatmul.mubr.bf16.gmra.mrb[0].mxu0 %v837
      %v2054 = vpop.f32.mrb[0].mxu0
      %v2055 = vadd.f32 %v1942, %v2054
      %v2056 = vpop.f32.mrb[0].mxu0
      %v2057 = vadd.f32 %v1944, %v2056
      %v2058 = vpop.f32.mrb[0].mxu0
      %v2059 = vadd.f32 %v1946, %v2058
      %v2060 = vpop.f32.mrb[0].mxu0
      %v2061 = vadd.f32 %v1948, %v2060
      %2062 = vmatprep.mubr.bf16.mxu0 %v842
      %2063 = vmatmul.mubr.bf16.gmra.mrb[0].mxu0 %v841
      %v2064 = vpop.f32.mrb[0].mxu0
      %v2065 = vadd.f32 %v1952, %v2064
      %v2066 = vpop.f32.mrb[0].mxu0
      %v2067 = vadd.f32 %v1954, %v2066
      %v2068 = vpop.f32.mrb[0].mxu0
      %v2069 = vadd.f32 %v1956, %v2068
      %v2070 = vpop.f32.mrb[0].mxu0
      %v2071 = vadd.f32 %v1958, %v2070
      %2072 = vmatprep.mubr.bf16.mxu0 %v846
      %2073 = vmatmul.mubr.bf16.gmra.mrb[0].mxu0 %v845
      %v2074 = vpop.f32.mrb[0].mxu0
      %v2075 = vadd.f32 %v1962, %v2074
      %v2076 = vpop.f32.mrb[0].mxu0
      %v2077 = vadd.f32 %v1964, %v2076
      %v2078 = vpop.f32.mrb[0].mxu0
      %v2079 = vadd.f32 %v1966, %v2078
      %v2080 = vpop.f32.mrb[0].mxu0
      %v2081 = vadd.f32 %v1968, %v2080
      %2082 = vmatprep.mubr.bf16.mxu0 %v850
      %2083 = vmatmul.mubr.bf16.gmra.mrb[0].mxu0 %v849
      %v2084 = vpop.f32.mrb[0].mxu0
      %v2085 = vadd.f32 %v1972, %v2084
      %v2086 = vpop.f32.mrb[0].mxu0
      %v2087 = vadd.f32 %v1974, %v2086
      %v2088 = vpop.f32.mrb[0].mxu0
      %v2089 = vadd.f32 %v1976, %v2088
      %v2090 = vpop.f32.mrb[0].mxu0
      %v2091 = vadd.f32 %v1978, %v2090
      %2092 = vdwg.mxu0
      %v2093 = vpack.c.bf16 %v1793, %v1789
      %v2094 = vpack.c.bf16 %v1795, %v1791
      %v2095 = vpack.c.bf16 %v2019, %v2015
      %v2096 = vpack.c.bf16 %v2021, %v2017
      %v2097 = vpack.c.bf16 %v1803, %v1799
      %v2098 = vpack.c.bf16 %v1805, %v1801
      %v2099 = vpack.c.bf16 %v2029, %v2025
      %v2100 = vpack.c.bf16 %v2031, %v2027
      %v2101 = vpack.c.bf16 %v1813, %v1809
      %v2102 = vpack.c.bf16 %v1815, %v1811
      %v2103 = vpack.c.bf16 %v2039, %v2035
      %v2104 = vpack.c.bf16 %v2041, %v2037
      %v2105 = vpack.c.bf16 %v1823, %v1819
      %v2106 = vpack.c.bf16 %v1825, %v1821
      %v2107 = vpack.c.bf16 %v2049, %v2045
      %v2108 = vpack.c.bf16 %v2051, %v2047
      %v2109 = vpack.c.bf16 %v1833, %v1829
      %v2110 = vpack.c.bf16 %v1835, %v1831
      %v2111 = vpack.c.bf16 %v2059, %v2055
      %v2112 = vpack.c.bf16 %v2061, %v2057
      %v2113 = vpack.c.bf16 %v1843, %v1839
      %v2114 = vpack.c.bf16 %v1845, %v1841
      %v2115 = vpack.c.bf16 %v2069, %v2065
      %v2116 = vpack.c.bf16 %v2071, %v2067
      %v2117 = vpack.c.bf16 %v1853, %v1849
      %v2118 = vpack.c.bf16 %v1855, %v1851
      %v2119 = vpack.c.bf16 %v2079, %v2075
      %v2120 = vpack.c.bf16 %v2081, %v2077
      %v2121 = vpack.c.bf16 %v1863, %v1859
      %v2122 = vpack.c.bf16 %v1865, %v1861
      %v2123 = vpack.c.bf16 %v2089, %v2085
      %v2124 = vpack.c.bf16 %v2091, %v2087
      %v2125 = vtanh.bf16.pop %v2093
      %v2126 = vtanh.bf16.pop %v2094
      %v2127 = vtanh.bf16.pop %v2095
      %v2128 = vtanh.bf16.pop %v2096
      %v2129 = vtanh.bf16.pop %v2097
      %v2130 = vtanh.bf16.pop %v2098
      %v2131 = vtanh.bf16.pop %v2099
      %v2132 = vtanh.bf16.pop %v2100
      %v2133 = vtanh.bf16.pop %v2101
      %v2134 = vtanh.bf16.pop %v2102
      %v2135 = vtanh.bf16.pop %v2103
      %v2136 = vtanh.bf16.pop %v2104
      %v2137 = vtanh.bf16.pop %v2105
      %v2138 = vtanh.bf16.pop %v2106
      %v2139 = vtanh.bf16.pop %v2107
      %v2140 = vtanh.bf16.pop %v2108
      %v2141 = vtanh.bf16.pop %v2109
      %v2142 = vtanh.bf16.pop %v2110
      %v2143 = vtanh.bf16.pop %v2111
      %v2144 = vtanh.bf16.pop %v2112
      %v2145 = vtanh.bf16.pop %v2113
      %v2146 = vtanh.bf16.pop %v2114
      %v2147 = vtanh.bf16.pop %v2115
      %v2148 = vtanh.bf16.pop %v2116
      %v2149 = vtanh.bf16.pop %v2117
      %v2150 = vtanh.bf16.pop %v2118
      %v2151 = vtanh.bf16.pop %v2119
      %v2152 = vtanh.bf16.pop %v2120
      %v2153 = vtanh.bf16.pop %v2121
      %v2154 = vtanh.bf16.pop %v2122
      %v2155 = vtanh.bf16.pop %v2123
      %v2156 = vtanh.bf16.pop %v2124
      %v2157 = vld [vmem:[%s5] sm:$0xf]
      %v2158 = vld [vmem:[%s5 + $0x4] sm:$0xf]
      %v2159 = vld [vmem:[%s5 + $0x8] sm:$0xf]
      %v2160 = vld [vmem:[%s5 + $0xc] sm:$0xf]
      %v2161 = vld [vmem:[%s5 + $0x10] sm:$0xf]
      %v2162 = vld [vmem:[%s5 + $0x14] sm:$0xf]
      %v2163 = vld [vmem:[%s5 + $0x18] sm:$0xf]
      %v2164 = vld [vmem:[%s5 + $0x1c] sm:$0xf]
      %v2165 = vld [vmem:[%s5 + $0x20] sm:$0xf]
      %v2166 = vld [vmem:[%s5 + $0x24] sm:$0xf]
      %v2167 = vld [vmem:[%s5 + $0x28] sm:$0xf]
      %v2168 = vld [vmem:[%s5 + $0x2c] sm:$0xf]
      %v2169 = vld [vmem:[%s5 + $0x30] sm:$0xf]
      %v2170 = vld [vmem:[%s5 + $0x34] sm:$0xf]
      %v2171 = vld [vmem:[%s5 + $0x38] sm:$0xf]
      %v2172 = vld [vmem:[%s5 + $0x3c] sm:$0xf]
      %v2173 = vld [vmem:[%s5 + $0x40] sm:$0xf]
      %v2174 = vld [vmem:[%s5 + $0x44] sm:$0xf]
      %v2175 = vld [vmem:[%s5 + $0x48] sm:$0xf]
      %v2176 = vld [vmem:[%s5 + $0x4c] sm:$0xf]
      %v2177 = vld [vmem:[%s5 + $0x50] sm:$0xf]
      %v2178 = vld [vmem:[%s5 + $0x54] sm:$0xf]
      %v2179 = vld [vmem:[%s5 + $0x58] sm:$0xf]
      %v2180 = vld [vmem:[%s5 + $0x5c] sm:$0xf]
      %v2181 = vld [vmem:[%s5 + $0x60] sm:$0xf]
      %v2182 = vld [vmem:[%s5 + $0x64] sm:$0xf]
      %v2183 = vld [vmem:[%s5 + $0x68] sm:$0xf]
      %v2184 = vld [vmem:[%s5 + $0x6c] sm:$0xf]
      %v2185 = vld [vmem:[%s5 + $0x70] sm:$0xf]
      %v2186 = vld [vmem:[%s5 + $0x74] sm:$0xf]
      %v2187 = vld [vmem:[%s5 + $0x78] sm:$0xf]
      %v2188 = vld [vmem:[%s5 + $0x7c] sm:$0xf]
      %v2189 = vld [vmem:[%s5 + $0x80] sm:$0xf]
      %v2190 = vld [vmem:[%s5 + $0x84] sm:$0xf]
      %v2191 = vld [vmem:[%s5 + $0x88] sm:$0xf]
      %v2192 = vld [vmem:[%s5 + $0x8c] sm:$0xf]
      %v2193 = vld [vmem:[%s5 + $0x90] sm:$0xf]
      %v2194 = vld [vmem:[%s5 + $0x94] sm:$0xf]
      %v2195 = vld [vmem:[%s5 + $0x98] sm:$0xf]
      %v2196 = vld [vmem:[%s5 + $0x9c] sm:$0xf]
      %v2197 = vld [vmem:[%s5 + $0xa0] sm:$0xf]
      %v2198 = vld [vmem:[%s5 + $0xa4] sm:$0xf]
      %v2199 = vld [vmem:[%s5 + $0xa8] sm:$0xf]
      %v2200 = vld [vmem:[%s5 + $0xac] sm:$0xf]
      %v2201 = vld [vmem:[%s5 + $0xb0] sm:$0xf]
      %v2202 = vld [vmem:[%s5 + $0xb4] sm:$0xf]
      %v2203 = vld [vmem:[%s5 + $0xb8] sm:$0xf]
      %v2204 = vld [vmem:[%s5 + $0xbc] sm:$0xf]
      %v2205 = vld [vmem:[%s5 + $0xc0] sm:$0xf]
      %v2206 = vld [vmem:[%s5 + $0xc4] sm:$0xf]
      %v2207 = vld [vmem:[%s5 + $0xc8] sm:$0xf]
      %v2208 = vld [vmem:[%s5 + $0xcc] sm:$0xf]
      %v2209 = vld [vmem:[%s5 + $0xd0] sm:$0xf]
      %v2210 = vld [vmem:[%s5 + $0xd4] sm:$0xf]
      %v2211 = vld [vmem:[%s5 + $0xd8] sm:$0xf]
      %v2212 = vld [vmem:[%s5 + $0xdc] sm:$0xf]
      %v2213 = vld [vmem:[%s5 + $0xe0] sm:$0xf]
      %v2214 = vld [vmem:[%s5 + $0xe4] sm:$0xf]
      %v2215 = vld [vmem:[%s5 + $0xe8] sm:$0xf]
      %v2216 = vld [vmem:[%s5 + $0xec] sm:$0xf]
      %v2217 = vld [vmem:[%s5 + $0xf0] sm:$0xf]
      %v2218 = vld [vmem:[%s5 + $0xf4] sm:$0xf]
      %v2219 = vld [vmem:[%s5 + $0xf8] sm:$0xf]
      %v2220 = vld [vmem:[%s5 + $0xfc] sm:$0xf]
      %v2221 = vld [vmem:[%s6] sm:$0x1]
      %v2223 = vlaneseq
      %v2224 = vshrl.u32 %v2223, 7
      %v2225 = vsub.s32 0, %v2224
      %v2226 = vrot.slane %v2221, %v2225
      %v2292 = vunpack.c.l.b16 %v2157
      %v2293 = vunpack.c.l.b16 %v2158
      %v2294 = vunpack.c.l.b16 %v2159
      %v2295 = vunpack.c.l.b16 %v2160
      %v2296 = vunpack.c.l.b16 %v2161
      %v2297 = vunpack.c.l.b16 %v2162
      %v2298 = vunpack.c.l.b16 %v2163
      %v2299 = vunpack.c.l.b16 %v2164
      %v2300 = vunpack.c.l.b16 %v2165
      %v2301 = vunpack.c.l.b16 %v2166
      %v2302 = vunpack.c.l.b16 %v2167
      %v2303 = vunpack.c.l.b16 %v2168
      %v2304 = vunpack.c.l.b16 %v2169
      %v2305 = vunpack.c.l.b16 %v2170
      %v2306 = vunpack.c.l.b16 %v2171
      %v2307 = vunpack.c.l.b16 %v2172
      %v2308 = vunpack.c.l.b16 %v2173
      %v2309 = vunpack.c.l.b16 %v2174
      %v2310 = vunpack.c.l.b16 %v2175
      %v2311 = vunpack.c.l.b16 %v2176
      %v2312 = vunpack.c.l.b16 %v2177
      %v2313 = vunpack.c.l.b16 %v2178
      %v2314 = vunpack.c.l.b16 %v2179
      %v2315 = vunpack.c.l.b16 %v2180
      %v2316 = vunpack.c.l.b16 %v2181
      %v2317 = vunpack.c.l.b16 %v2182
      %v2318 = vunpack.c.l.b16 %v2183
      %v2319 = vunpack.c.l.b16 %v2184
      %v2320 = vunpack.c.l.b16 %v2185
      %v2321 = vunpack.c.l.b16 %v2186
      %v2322 = vunpack.c.l.b16 %v2187
      %v2323 = vunpack.c.l.b16 %v2188
      %v2324 = vunpack.c.l.b16 %v2189
      %v2325 = vunpack.c.l.b16 %v2190
      %v2326 = vunpack.c.l.b16 %v2191
      %v2327 = vunpack.c.l.b16 %v2192
      %v2328 = vunpack.c.l.b16 %v2193
      %v2329 = vunpack.c.l.b16 %v2194
      %v2330 = vunpack.c.l.b16 %v2195
      %v2331 = vunpack.c.l.b16 %v2196
      %v2332 = vunpack.c.l.b16 %v2197
      %v2333 = vunpack.c.l.b16 %v2198
      %v2334 = vunpack.c.l.b16 %v2199
      %v2335 = vunpack.c.l.b16 %v2200
      %v2336 = vunpack.c.l.b16 %v2201
      %v2337 = vunpack.c.l.b16 %v2202
      %v2338 = vunpack.c.l.b16 %v2203
      %v2339 = vunpack.c.l.b16 %v2204
      %v2340 = vunpack.c.l.b16 %v2205
      %v2341 = vunpack.c.l.b16 %v2206
      %v2342 = vunpack.c.l.b16 %v2207
      %v2343 = vunpack.c.l.b16 %v2208
      %v2344 = vunpack.c.l.b16 %v2209
      %v2345 = vunpack.c.l.b16 %v2210
      %v2346 = vunpack.c.l.b16 %v2211
      %v2347 = vunpack.c.l.b16 %v2212
      %v2348 = vunpack.c.l.b16 %v2213
      %v2349 = vunpack.c.l.b16 %v2214
      %v2350 = vunpack.c.l.b16 %v2215
      %v2351 = vunpack.c.l.b16 %v2216
      %v2352 = vunpack.c.l.b16 %v2217
      %v2353 = vunpack.c.l.b16 %v2218
      %v2354 = vunpack.c.l.b16 %v2219
      %v2355 = vunpack.c.l.b16 %v2220
      %v2356 = vpack.c.b16 %v2293, %v2292
      %v2357 = vpack.c.b16 %v2295, %v2294
      %v2358 = vpack.c.b16 %v2297, %v2296
      %v2359 = vpack.c.b16 %v2299, %v2298
      %v2360 = vpack.c.b16 %v2301, %v2300
      %v2361 = vpack.c.b16 %v2303, %v2302
      %v2362 = vpack.c.b16 %v2305, %v2304
      %v2363 = vpack.c.b16 %v2307, %v2306
      %v2364 = vpack.c.b16 %v2309, %v2308
      %v2365 = vpack.c.b16 %v2311, %v2310
      %v2366 = vpack.c.b16 %v2313, %v2312
      %v2367 = vpack.c.b16 %v2315, %v2314
      %v2368 = vpack.c.b16 %v2317, %v2316
      %v2369 = vpack.c.b16 %v2319, %v2318
      %v2370 = vpack.c.b16 %v2321, %v2320
      %v2371 = vpack.c.b16 %v2323, %v2322
      %v2372 = vpack.c.b16 %v2325, %v2324
      %v2373 = vpack.c.b16 %v2327, %v2326
      %v2374 = vpack.c.b16 %v2329, %v2328
      %v2375 = vpack.c.b16 %v2331, %v2330
      %v2376 = vpack.c.b16 %v2333, %v2332
      %v2377 = vpack.c.b16 %v2335, %v2334
      %v2378 = vpack.c.b16 %v2337, %v2336
      %v2379 = vpack.c.b16 %v2339, %v2338
      %v2380 = vpack.c.b16 %v2341, %v2340
      %v2381 = vpack.c.b16 %v2343, %v2342
      %v2382 = vpack.c.b16 %v2345, %v2344
      %v2383 = vpack.c.b16 %v2347, %v2346
      %v2384 = vpack.c.b16 %v2349, %v2348
      %v2385 = vpack.c.b16 %v2351, %v2350
      %v2386 = vpack.c.b16 %v2353, %v2352
      %v2387 = vpack.c.b16 %v2355, %v2354
      %2420 = vmatprep.subr.bf16.mxu0 0
      %2421 = vmatpush1.bf16.msra.mxu0 %v2356
      %2422 = vmatprep.subr.bf16.mxu0 0
      %2423 = vmatpush1.bf16.msra.mxu0 %v2357
      %2424 = vmatprep.subr.bf16.mxu0 0
      %2425 = vmatpush1.bf16.msra.mxu0 %v2358
      %2426 = vmatprep.subr.bf16.mxu0 0
      %2427 = vmatpush1.bf16.msra.mxu0 %v2359
      %2428 = vmatprep.subr.bf16.mxu0 0
      %2429 = vmatpush1.bf16.msra.mxu0 %v2360
      %2430 = vmatprep.subr.bf16.mxu0 0
      %2431 = vmatpush1.bf16.msra.mxu0 %v2361
      %2432 = vmatprep.subr.bf16.mxu0 0
      %2433 = vmatpush1.bf16.msra.mxu0 %v2362
      %2434 = vmatprep.subr.bf16.mxu0 0
      %2435 = vmatpush1.bf16.msra.mxu0 %v2363
      %2436 = vmatprep.subr.bf16.mxu0 0
      %2437 = vmatpush1.bf16.msra.mxu0 %v2364
      %2438 = vmatprep.subr.bf16.mxu0 0
      %2439 = vmatpush1.bf16.msra.mxu0 %v2365
      %2440 = vmatprep.subr.bf16.mxu0 0
      %2441 = vmatpush1.bf16.msra.mxu0 %v2366
      %2442 = vmatprep.subr.bf16.mxu0 0
      %2443 = vmatpush1.bf16.msra.mxu0 %v2367
      %2444 = vmatprep.subr.bf16.mxu0 0
      %2445 = vmatpush1.bf16.msra.mxu0 %v2368
      %2446 = vmatprep.subr.bf16.mxu0 0
      %2447 = vmatpush1.bf16.msra.mxu0 %v2369
      %2448 = vmatprep.subr.bf16.mxu0 0
      %2449 = vmatpush1.bf16.msra.mxu0 %v2370
      %2450 = vmatprep.subr.bf16.mxu0 0
      %2451 = vmatpush1.bf16.msra.mxu0 %v2371
      %2452 = vmatprep.mubr.bf16.mxu0 %v2126
      %2453 = vmatmul.mubr.bf16.gmra.mrb[0].mxu0 %v2125
      %v2454 = vpop.f32.mrb[0].mxu0
      %v2455 = vadd.f32 %v2226, %v2454
      %v2456 = vpop.f32.mrb[0].mxu0
      %v2457 = vpop.f32.mrb[0].mxu0
      %v2458 = vadd.f32 %v2226, %v2457
      %v2459 = vpop.f32.mrb[0].mxu0
      %2460 = vmatprep.mubr.bf16.mxu0 %v2130
      %2461 = vmatmul.mubr.bf16.gmra.mrb[0].mxu0 %v2129
      %v2462 = vpop.f32.mrb[0].mxu0
      %v2463 = vadd.f32 %v2226, %v2462
      %v2464 = vpop.f32.mrb[0].mxu0
      %v2465 = vpop.f32.mrb[0].mxu0
      %v2466 = vadd.f32 %v2226, %v2465
      %v2467 = vpop.f32.mrb[0].mxu0
      %2468 = vmatprep.mubr.bf16.mxu0 %v2134
      %2469 = vmatmul.mubr.bf16.gmra.mrb[0].mxu0 %v2133
      %v2470 = vpop.f32.mrb[0].mxu0
      %v2471 = vadd.f32 %v2226, %v2470
      %v2472 = vpop.f32.mrb[0].mxu0
      %v2473 = vpop.f32.mrb[0].mxu0
      %v2474 = vadd.f32 %v2226, %v2473
      %v2475 = vpop.f32.mrb[0].mxu0
      %2476 = vmatprep.mubr.bf16.mxu0 %v2138
      %2477 = vmatmul.mubr.bf16.gmra.mrb[0].mxu0 %v2137
      %v2478 = vpop.f32.mrb[0].mxu0
      %v2479 = vadd.f32 %v2226, %v2478
      %v2480 = vpop.f32.mrb[0].mxu0
      %v2481 = vpop.f32.mrb[0].mxu0
      %v2482 = vadd.f32 %v2226, %v2481
      %v2483 = vpop.f32.mrb[0].mxu0
      %2484 = vmatprep.mubr.bf16.mxu0 %v2142
      %2485 = vmatmul.mubr.bf16.gmra.mrb[0].mxu0 %v2141
      %v2486 = vpop.f32.mrb[0].mxu0
      %v2487 = vadd.f32 %v2226, %v2486
      %v2488 = vpop.f32.mrb[0].mxu0
      %v2489 = vpop.f32.mrb[0].mxu0
      %v2490 = vadd.f32 %v2226, %v2489
      %v2491 = vpop.f32.mrb[0].mxu0
      %2492 = vmatprep.mubr.bf16.mxu0 %v2146
      %2493 = vmatmul.mubr.bf16.gmra.mrb[0].mxu0 %v2145
      %v2494 = vpop.f32.mrb[0].mxu0
      %v2495 = vadd.f32 %v2226, %v2494
      %v2496 = vpop.f32.mrb[0].mxu0
      %v2497 = vpop.f32.mrb[0].mxu0
      %v2498 = vadd.f32 %v2226, %v2497
      %v2499 = vpop.f32.mrb[0].mxu0
      %2500 = vmatprep.mubr.bf16.mxu0 %v2150
      %2501 = vmatmul.mubr.bf16.gmra.mrb[0].mxu0 %v2149
      %v2502 = vpop.f32.mrb[0].mxu0
      %v2503 = vadd.f32 %v2226, %v2502
      %v2504 = vpop.f32.mrb[0].mxu0
      %v2505 = vpop.f32.mrb[0].mxu0
      %v2506 = vadd.f32 %v2226, %v2505
      %v2507 = vpop.f32.mrb[0].mxu0
      %2508 = vmatprep.mubr.bf16.mxu0 %v2154
      %2509 = vmatmul.mubr.bf16.gmra.mrb[0].mxu0 %v2153
      %v2510 = vpop.f32.mrb[0].mxu0
      %v2511 = vadd.f32 %v2226, %v2510
      %v2512 = vpop.f32.mrb[0].mxu0
      %v2513 = vpop.f32.mrb[0].mxu0
      %v2514 = vadd.f32 %v2226, %v2513
      %v2515 = vpop.f32.mrb[0].mxu0
      %2516 = vdwg.mxu0
      %2517 = vmatprep.subr.bf16.mxu0 0
      %2518 = vmatpush1.bf16.msra.mxu0 %v2372
      %2519 = vmatprep.subr.bf16.mxu0 0
      %2520 = vmatpush1.bf16.msra.mxu0 %v2373
      %2521 = vmatprep.subr.bf16.mxu0 0
      %2522 = vmatpush1.bf16.msra.mxu0 %v2374
      %2523 = vmatprep.subr.bf16.mxu0 0
      %2524 = vmatpush1.bf16.msra.mxu0 %v2375
      %2525 = vmatprep.subr.bf16.mxu0 0
      %2526 = vmatpush1.bf16.msra.mxu0 %v2376
      %2527 = vmatprep.subr.bf16.mxu0 0
      %2528 = vmatpush1.bf16.msra.mxu0 %v2377
      %2529 = vmatprep.subr.bf16.mxu0 0
      %2530 = vmatpush1.bf16.msra.mxu0 %v2378
      %2531 = vmatprep.subr.bf16.mxu0 0
      %2532 = vmatpush1.bf16.msra.mxu0 %v2379
      %2533 = vmatprep.subr.bf16.mxu0 0
      %2534 = vmatpush1.bf16.msra.mxu0 %v2380
      %2535 = vmatprep.subr.bf16.mxu0 0
      %2536 = vmatpush1.bf16.msra.mxu0 %v2381
      %2537 = vmatprep.subr.bf16.mxu0 0
      %2538 = vmatpush1.bf16.msra.mxu0 %v2382
      %2539 = vmatprep.subr.bf16.mxu0 0
      %2540 = vmatpush1.bf16.msra.mxu0 %v2383
      %2541 = vmatprep.subr.bf16.mxu0 0
      %2542 = vmatpush1.bf16.msra.mxu0 %v2384
      %2543 = vmatprep.subr.bf16.mxu0 0
      %2544 = vmatpush1.bf16.msra.mxu0 %v2385
      %2545 = vmatprep.subr.bf16.mxu0 0
      %2546 = vmatpush1.bf16.msra.mxu0 %v2386
      %2547 = vmatprep.subr.bf16.mxu0 0
      %2548 = vmatpush1.bf16.msra.mxu0 %v2387
      %2549 = vmatprep.mubr.bf16.mxu0 %v2128
      %2550 = vmatmul.mubr.bf16.gmra.mrb[0].mxu0 %v2127
      %v2551 = vpop.f32.mrb[0].mxu0
      %v2552 = vadd.f32 %v2455, %v2551
      %v2553 = vpop.f32.mrb[0].mxu0
      %v2554 = vpop.f32.mrb[0].mxu0
      %v2555 = vadd.f32 %v2458, %v2554
      %v2556 = vpop.f32.mrb[0].mxu0
      %2557 = vmatprep.mubr.bf16.mxu0 %v2132
      %2558 = vmatmul.mubr.bf16.gmra.mrb[0].mxu0 %v2131
      %v2559 = vpop.f32.mrb[0].mxu0
      %v2560 = vadd.f32 %v2463, %v2559
      %v2561 = vpop.f32.mrb[0].mxu0
      %v2562 = vpop.f32.mrb[0].mxu0
      %v2563 = vadd.f32 %v2466, %v2562
      %v2564 = vpop.f32.mrb[0].mxu0
      %2565 = vmatprep.mubr.bf16.mxu0 %v2136
      %2566 = vmatmul.mubr.bf16.gmra.mrb[0].mxu0 %v2135
      %v2567 = vpop.f32.mrb[0].mxu0
      %v2568 = vadd.f32 %v2471, %v2567
      %v2569 = vpop.f32.mrb[0].mxu0
      %v2570 = vpop.f32.mrb[0].mxu0
      %v2571 = vadd.f32 %v2474, %v2570
      %v2572 = vpop.f32.mrb[0].mxu0
      %2573 = vmatprep.mubr.bf16.mxu0 %v2140
      %2574 = vmatmul.mubr.bf16.gmra.mrb[0].mxu0 %v2139
      %v2575 = vpop.f32.mrb[0].mxu0
      %v2576 = vadd.f32 %v2479, %v2575
      %v2577 = vpop.f32.mrb[0].mxu0
      %v2578 = vpop.f32.mrb[0].mxu0
      %v2579 = vadd.f32 %v2482, %v2578
      %v2580 = vpop.f32.mrb[0].mxu0
      %2581 = vmatprep.mubr.bf16.mxu0 %v2144
      %2582 = vmatmul.mubr.bf16.gmra.mrb[0].mxu0 %v2143
      %v2583 = vpop.f32.mrb[0].mxu0
      %v2584 = vadd.f32 %v2487, %v2583
      %v2585 = vpop.f32.mrb[0].mxu0
      %v2586 = vpop.f32.mrb[0].mxu0
      %v2587 = vadd.f32 %v2490, %v2586
      %v2588 = vpop.f32.mrb[0].mxu0
      %2589 = vmatprep.mubr.bf16.mxu0 %v2148
      %2590 = vmatmul.mubr.bf16.gmra.mrb[0].mxu0 %v2147
      %v2591 = vpop.f32.mrb[0].mxu0
      %v2592 = vadd.f32 %v2495, %v2591
      %v2593 = vpop.f32.mrb[0].mxu0
      %v2594 = vpop.f32.mrb[0].mxu0
      %v2595 = vadd.f32 %v2498, %v2594
      %v2596 = vpop.f32.mrb[0].mxu0
      %2597 = vmatprep.mubr.bf16.mxu0 %v2152
      %2598 = vmatmul.mubr.bf16.gmra.mrb[0].mxu0 %v2151
      %v2599 = vpop.f32.mrb[0].mxu0
      %v2600 = vadd.f32 %v2503, %v2599
      %v2601 = vpop.f32.mrb[0].mxu0
      %v2602 = vpop.f32.mrb[0].mxu0
      %v2603 = vadd.f32 %v2506, %v2602
      %v2604 = vpop.f32.mrb[0].mxu0
      %2605 = vmatprep.mubr.bf16.mxu0 %v2156
      %2606 = vmatmul.mubr.bf16.gmra.mrb[0].mxu0 %v2155
      %v2607 = vpop.f32.mrb[0].mxu0
      %v2608 = vadd.f32 %v2511, %v2607
      %v2609 = vpop.f32.mrb[0].mxu0
      %v2610 = vpop.f32.mrb[0].mxu0
      %v2611 = vadd.f32 %v2514, %v2610
      %v2612 = vpop.f32.mrb[0].mxu0
      %2613 = vdwg.mxu0
      %vm2614 = vcmask 64512
      %2615 = vst.msk [vmem:[%s280] sm:$0xff] %vm2614, %v2552
      %2616 = vst.msk [vmem:[%s280 + $0x8] sm:$0xff] %vm2614, %v2555
      %2617 = vst.msk [vmem:[%s280 + $0x10] sm:$0xff] %vm2614, %v2560
      %2618 = vst.msk [vmem:[%s280 + $0x18] sm:$0xff] %vm2614, %v2563
      %2619 = vst.msk [vmem:[%s280 + $0x20] sm:$0xff] %vm2614, %v2568
      %2620 = vst.msk [vmem:[%s280 + $0x28] sm:$0xff] %vm2614, %v2571
      %2621 = vst.msk [vmem:[%s280 + $0x30] sm:$0xff] %vm2614, %v2576
      %2622 = vst.msk [vmem:[%s280 + $0x38] sm:$0xff] %vm2614, %v2579
      %2623 = vst.msk [vmem:[%s280 + $0x40] sm:$0xff] %vm2614, %v2584
      %2624 = vst.msk [vmem:[%s280 + $0x48] sm:$0xff] %vm2614, %v2587
      %2625 = vst.msk [vmem:[%s280 + $0x50] sm:$0xff] %vm2614, %v2592
      %2626 = vst.msk [vmem:[%s280 + $0x58] sm:$0xff] %vm2614, %v2595
      %2627 = vst.msk [vmem:[%s280 + $0x60] sm:$0xff] %vm2614, %v2600
      %2628 = vst.msk [vmem:[%s280 + $0x68] sm:$0xff] %vm2614, %v2603
      %2629 = vst.msk [vmem:[%s280 + $0x70] sm:$0xff] %vm2614, %v2608
      %2630 = vst.msk [vmem:[%s280 + $0x78] sm:$0xff] %vm2614, %v2611
      %s2631 = smul.u32 16, %s18
      %p2632 = scmp.lt.s32.totalorder %s2631, 47
      %s2633 = scalar_select %p2632, %s2631, 47
      %s2634 = smul.addr %s2633, 8
      %s2635 = scalar_lea.vmem %s7, %s2634
      // Predicated region
      $region49: #{critic_forward.1} parent=47 // pred_check
        %p2636 = pneg %p188
      $region50: #{critic_forward.1} parent=47 // pred_check_branch
        %2638 = sbr.rel (%p2636) target = $region52
      $region51: #{critic_forward.1} parent=47 // pred_region
        %s2639 = smul.u32 16, %s18
      $region52: #{critic_forward.1} parent=47 // pred_fallthru
        _
    $region48: #{critic_forward.1} parent=5 // pred_fallthru
      _
    %p2640 = scmp.le.s32.totalorder 2, %s13
    // Predicated region
    $region53: #{critic_forward.1} parent=5 // pred_check
      %p2641 = pneg %p2640
    $region54: #{critic_forward.1} parent=5 // pred_check_branch
      %2643 = sbr.rel (%p2641) target = $region56
    $region55: #{critic_forward.1} parent=5 // pred_region
      %s2644 = ssub.s32 %s13, 2
      // Predicated region
      $region57: #{critic_forward.1} parent=55 // pred_check
        %p2645 = pneg %p194
      $region58: #{critic_forward.1} parent=55 // pred_check_branch
        %2647 = sbr.rel (%p2645) target = $region60
      $region59: #{critic_forward.1} parent=55 // pred_region
        %s2648 = smul.u32 16, %s19
        %p2649 = scmp.lt.s32.totalorder %s2648, 47
        %s2650 = scalar_select %p2649, %s2648, 47
        %s2651 = smul.addr %s2650, 8
        %s2652 = scalar_lea.vmem %s7, %s2651
      $region60: #{critic_forward.1} parent=55 // pred_fallthru
        _
    $region56: #{critic_forward.1} parent=5 // pred_fallthru
      _
  $region6: #{critic_forward.1} parent=0 // loop_footer
    %s17 = sadd.s32 1, %s13
  $region7: #{critic_forward.1} parent=0 // loop_footer_branch
    %12 = sbr.rel target = $region3
  $region8: #{critic_forward.1} parent=0 // loop_exit
    _

</llo_original>
